<compile_context>
chip_gen: v7x
topology: tpu7x:2x2x1
jax: 0.10.0
libtpu: 0.0.40
codegen_flags: <defaults>
</compile_context>

<pallas_src>
import jax
import jax.numpy as jnp
from jax.experimental import pallas as pl
from jax.experimental.pallas import tpu as pltpu


def _round_up(n, m):
    return ((n + m - 1) // m) * m


def _make_decoder_kernel(num_linear_layers):
    """Fused MLP kernel for `num_linear_layers` Linear layers.

    ReLU after every Linear except the last (PyTorch Decoder, add_bn=False).
    """

    def kernel(*refs):
        x_ref = refs[0]
        o_ref = refs[-1]
        param_refs = refs[1:-1]  # (w1, b1, w2, b2, ..., wL, bL)
        assert len(param_refs) == 2 * num_linear_layers

        h = x_ref[...]  # f32 activation tile
        for li in range(num_linear_layers):
            w = param_refs[2 * li][...]          # bf16 (in_pad, out_pad)
            b = param_refs[2 * li + 1][...]      # f32  (1, out_pad)
            acc = jnp.dot(
                h.astype(w.dtype), w, preferred_element_type=jnp.float32
            ) + b
            if li < num_linear_layers - 1:
                h = jnp.maximum(acc, 0.0)        # ReLU
            else:
                h = acc
        o_ref[...] = h.astype(o_ref.dtype)

    return kernel


def decoder_forward(x, weights, biases, sigma, *, batch_tile=256,
                    weight_dtype=jnp.bfloat16, single_buffer_weights=True):
    """Fused TVAE Decoder forward.

    Args:
      x:       (B, embedding_dim) float32
      weights: list of (in, out) float32 arrays for each Linear layer
      biases:  list of (out,) float32 arrays
      sigma:   (data_dim,) float32 parameter
    Returns:
      (out, sigma) with out of shape (B, data_dim).
    """
    B, embedding_dim = x.shape
    data_dim = weights[-1].shape[1]
    num_layers = len(weights)

    # ---- pad every feature dim to a multiple of 128 (lane-dense) ----------
    dims = [embedding_dim] + [w.shape[1] for w in weights]
    dims_pad = [_round_up(d, 128) for d in dims]
    in_pad, out_pad = dims_pad[0], dims_pad[-1]

    # ---- batch tiling ------------------------------------------------------
    eff_tile = min(batch_tile, _round_up(B, 8))
    eff_tile = _round_up(eff_tile, 8)
    B_pad = _round_up(B, eff_tile)

    x_padded = jnp.pad(x, ((0, B_pad - B), (0, in_pad - embedding_dim)))

    # ---- pad + cast parameters --------------------------------------------
    w_padded, b_padded = [], []
    for li, (w, b) in enumerate(zip(weights, biases)):
        di, do = dims_pad[li], dims_pad[li + 1]
        w_p = jnp.pad(w.astype(weight_dtype),
                      ((0, di - w.shape[0]), (0, do - w.shape[1])))
        b_p = jnp.pad(b.astype(jnp.float32), (0, do - b.shape[0])).reshape(1, -1)
        w_padded.append(w_p)
        b_padded.append(b_p)

    params = []
    for w_p, b_p in zip(w_padded, b_padded):
        params.extend([w_p, b_p])

    # ---- explicit VMEM budget (bounded so it also fits v7x's 64 MiB) -------
    weight_bytes = sum(int(a.size) * a.dtype.itemsize for a in w_padded)
    bias_bytes = sum(int(a.size) * a.dtype.itemsize for a in b_padded)
    io_bytes = 2 * eff_tile * in_pad * 4 + 2 * eff_tile * out_pad * 4
    act_bytes = 4 * eff_tile * max(dims_pad) * 4  # live activation headroom
    approx_bytes = weight_bytes + bias_bytes + io_bytes + act_bytes
    vmem_limit = int(min(max(2 * approx_bytes, 32 * 2**20), 48 * 2**20))

    kernel = _make_decoder_kernel(num_layers)

    def _build_call(use_single_buffer):
        spec_kwargs = {}
        if use_single_buffer:
            # Grid-invariant blocks: no need to double-buffer them.
            spec_kwargs = dict(pipeline_mode=pl.Buffered(1))

        in_specs = [pl.BlockSpec((eff_tile, in_pad), lambda i: (i, 0))]
        for w_p, b_p in zip(w_padded, b_padded):
            in_specs.append(pl.BlockSpec(w_p.shape, lambda i: (0, 0), **spec_kwargs))
            in_specs.append(pl.BlockSpec(b_p.shape, lambda i: (0, 0), **spec_kwargs))
        out_spec = pl.BlockSpec((eff_tile, out_pad), lambda i: (i, 0))

        return pl.pallas_call(
            kernel,
            out_shape=jax.ShapeDtypeStruct((B_pad, out_pad), x.dtype),
            grid_spec=pltpu.PrefetchScalarGridSpec(
                num_scalar_prefetch=0,
                grid=(B_pad // eff_tile,),
                in_specs=in_specs,
                out_specs=out_spec,
            ),
            compiler_params=pltpu.CompilerParams(
                dimension_semantics=("parallel",),
                vmem_limit_bytes=vmem_limit,
            ),
        )

    try:
        out_padded = _build_call(single_buffer_weights)(x_padded, *params)
    except Exception:
        if not single_buffer_weights:
            raise
        # Fallback if pipeline_mode=pl.Buffered(1) is unsupported here.
        out_padded = _build_call(False)(x_padded, *params)

    out = out_padded[:B, :data_dim]
    return out, sigma


def init_decoder_params(key, embedding_dim, decompress_dims, data_dim):
    """Deterministic parameter init matching the module's layer shapes."""
    dims = [embedding_dim] + list(decompress_dims) + [data_dim]
    weights, biases = [], []
    for li in range(len(dims) - 1):
        key, wk, bk = jax.random.split(key, 3)
        fan_in, fan_out = dims[li], dims[li + 1]
        bound = 1.0 / jnp.sqrt(fan_in)
        w = jax.random.uniform(wk, (fan_in, fan_out), jnp.float32, -bound, bound)
        b = jax.random.uniform(bk, (fan_out,), jnp.float32, -bound, bound)
        weights.append(w)
        biases.append(b)
    sigma = jnp.ones((data_dim,), jnp.float32) * 0.1  # self.sigma parameter
    return weights, biases, sigma


def reference_forward_f32(x, weights, biases, sigma):
    """Pure-JAX f32 reference matching the PyTorch Decoder (add_bn=False)."""
    h = x
    for li, (w, b) in enumerate(zip(weights, biases)):
        h = h @ w + b
        if li < len(weights) - 1:
            h = jnp.maximum(h, 0.0)
    return h, sigma


def reference_forward_bf16(x, weights, biases, sigma):
    """Reference that mirrors the kernel's bf16-input / f32-accumulate math."""
    h = x
    for li, (w, b) in enumerate(zip(weights, biases)):
        h = jnp.dot(h.astype(jnp.bfloat16), w.astype(jnp.bfloat16),
                    preferred_element_type=jnp.float32) + b
        if li < len(weights) - 1:
            h = jnp.maximum(h, 0.0)
    return h, sigma


if __name__ == "__main__":
    # Shapes consistent with a small TVAE decoder (CTGAN defaults use
    # decompress_dims=(128, 128) and batch_size ~= 500).
    embedding_dim = 32
    decompress_dims = (128, 128)
    data_dim = 48
    batch = 512

    key = jax.random.PRNGKey(0)
    key, xk = jax.random.split(key)
    x = jax.random.normal(xk, (batch, embedding_dim), jnp.float32)

    weights, biases, sigma = init_decoder_params(
        key, embedding_dim, decompress_dims, data_dim
    )

    out, sig = decoder_forward(x, weights, biases, sigma, batch_tile=256)
    jax.block_until_ready(out)
    jax.block_until_ready(sig)

    # Correctness checks.
    ref_bf16_out, _ = reference_forward_bf16(x, weights, biases, sigma)
    ref_f32_out, ref_sig = reference_forward_f32(x, weights, biases, sigma)

    assert out.shape == (batch, data_dim)
    assert sig.shape == (data_dim,)
    # Tight check vs. the bf16-matmul reference (same arithmetic as kernel).
    assert jnp.allclose(out, ref_bf16_out, atol=1e-3, rtol=1e-3)
    # Loose check vs. full-f32 reference (bf16 weight quantization error only).
    assert jnp.allclose(out, ref_f32_out, atol=5e-2, rtol=5e-2)
    assert jnp.allclose(sig, ref_sig)

    print("KERNEL_OK")
</pallas_src>

<mosaic_0001>
module attributes {stable_mosaic.version = 11 : i64} {
  func.func @kernel(%arg0: i32, %arg1: memref<256x128xf32, #tpu.memory_space<vmem>>, %arg2: memref<128x128xbf16, #tpu.memory_space<vmem>>, %arg3: memref<1x128xf32, #tpu.memory_space<vmem>>, %arg4: memref<128x128xbf16, #tpu.memory_space<vmem>>, %arg5: memref<1x128xf32, #tpu.memory_space<vmem>>, %arg6: memref<128x128xbf16, #tpu.memory_space<vmem>>, %arg7: memref<1x128xf32, #tpu.memory_space<vmem>>, %arg8: memref<256x128xf32, #tpu.memory_space<vmem>>) attributes {dimension_semantics = [#tpu.dimension_semantics<parallel>], iteration_bounds = array<i64: 2>, scalar_prefetch = 0 : i64, scratch_operands = 0 : i64, tpu.core_type = #tpu.core_type<tc>, window_params = [{transform_indices = @transform_0, window_bounds = array<i64: 256, 128>}, {pipeline_mode = #tpu.pipeline_mode<synchronous>, transform_indices = @transform_1, window_bounds = array<i64: 128, 128>}, {pipeline_mode = #tpu.pipeline_mode<synchronous>, transform_indices = @transform_2, window_bounds = array<i64: 1, 128>}, {pipeline_mode = #tpu.pipeline_mode<synchronous>, transform_indices = @transform_3, window_bounds = array<i64: 128, 128>}, {pipeline_mode = #tpu.pipeline_mode<synchronous>, transform_indices = @transform_4, window_bounds = array<i64: 1, 128>}, {pipeline_mode = #tpu.pipeline_mode<synchronous>, transform_indices = @transform_5, window_bounds = array<i64: 128, 128>}, {pipeline_mode = #tpu.pipeline_mode<synchronous>, transform_indices = @transform_6, window_bounds = array<i64: 1, 128>}, {transform_indices = @transform_7, window_bounds = array<i64: 256, 128>}]} {
    %c0 = arith.constant 0 : index
    %c0_0 = arith.constant 0 : index
    %0 = vector.load %arg1[%c0, %c0_0] : memref<256x128xf32, #tpu.memory_space<vmem>>, vector<256x128xf32>
    %c0_1 = arith.constant 0 : index
    %c0_2 = arith.constant 0 : index
    %1 = vector.load %arg2[%c0_1, %c0_2] : memref<128x128xbf16, #tpu.memory_space<vmem>>, vector<128x128xbf16>
    %c0_3 = arith.constant 0 : index
    %c0_4 = arith.constant 0 : index
    %2 = vector.load %arg3[%c0_3, %c0_4] : memref<1x128xf32, #tpu.memory_space<vmem>>, vector<1x128xf32>
    %3 = arith.truncf %0 : vector<256x128xf32> to vector<256x128xbf16>
    %cst = arith.constant dense<0.000000e+00> : vector<256x128xf32>
    %4 = tpu.matmul %3, %1, %cst {dimension_numbers = #tpu.dot_dimension_numbers<[1], [0], [0], [1], [0, 0, 1, 1], [], []>} : vector<256x128xbf16>, vector<128x128xbf16>, vector<256x128xf32> -> vector<256x128xf32>
    %5 = vector.broadcast %2 : vector<1x128xf32> to vector<256x128xf32>
    %6 = arith.addf %4, %5 : vector<256x128xf32>
    %cst_5 = arith.constant 0.000000e+00 : f32
    %7 = vector.broadcast %cst_5 : f32 to vector<256x128xf32>
    %8 = arith.maximumf %6, %7 : vector<256x128xf32>
    %c0_6 = arith.constant 0 : index
    %c0_7 = arith.constant 0 : index
    %9 = vector.load %arg4[%c0_6, %c0_7] : memref<128x128xbf16, #tpu.memory_space<vmem>>, vector<128x128xbf16>
    %c0_8 = arith.constant 0 : index
    %c0_9 = arith.constant 0 : index
    %10 = vector.load %arg5[%c0_8, %c0_9] : memref<1x128xf32, #tpu.memory_space<vmem>>, vector<1x128xf32>
    %11 = arith.truncf %8 : vector<256x128xf32> to vector<256x128xbf16>
    %cst_10 = arith.constant dense<0.000000e+00> : vector<256x128xf32>
    %12 = tpu.matmul %11, %9, %cst_10 {dimension_numbers = #tpu.dot_dimension_numbers<[1], [0], [0], [1], [0, 0, 1, 1], [], []>} : vector<256x128xbf16>, vector<128x128xbf16>, vector<256x128xf32> -> vector<256x128xf32>
    %13 = vector.broadcast %10 : vector<1x128xf32> to vector<256x128xf32>
    %14 = arith.addf %12, %13 : vector<256x128xf32>
    %cst_11 = arith.constant 0.000000e+00 : f32
    %15 = vector.broadcast %cst_11 : f32 to vector<256x128xf32>
    %16 = arith.maximumf %14, %15 : vector<256x128xf32>
    %c0_12 = arith.constant 0 : index
    %c0_13 = arith.constant 0 : index
    %17 = vector.load %arg6[%c0_12, %c0_13] : memref<128x128xbf16, #tpu.memory_space<vmem>>, vector<128x128xbf16>
    %c0_14 = arith.constant 0 : index
    %c0_15 = arith.constant 0 : index
    %18 = vector.load %arg7[%c0_14, %c0_15] : memref<1x128xf32, #tpu.memory_space<vmem>>, vector<1x128xf32>
    %19 = arith.truncf %16 : vector<256x128xf32> to vector<256x128xbf16>
    %cst_16 = arith.constant dense<0.000000e+00> : vector<256x128xf32>
    %20 = tpu.matmul %19, %17, %cst_16 {dimension_numbers = #tpu.dot_dimension_numbers<[1], [0], [0], [1], [0, 0, 1, 1], [], []>} : vector<256x128xbf16>, vector<128x128xbf16>, vector<256x128xf32> -> vector<256x128xf32>
    %21 = vector.broadcast %18 : vector<1x128xf32> to vector<256x128xf32>
    %22 = arith.addf %20, %21 : vector<256x128xf32>
    %c0_17 = arith.constant 0 : index
    %c0_18 = arith.constant 0 : index
    %23 = vector.load %arg8[%c0_17, %c0_18] : memref<256x128xf32, #tpu.memory_space<vmem>>, vector<256x128xf32>
    tpu.vector_store %arg8[%c0_17, %c0_18], %22 {strides = array<i32>} : memref<256x128xf32, #tpu.memory_space<vmem>>, vector<256x128xf32>,
    return
  }
  func.func @transform_0(%arg0: i32) -> (i32, i32) {
    %c0_i32 = arith.constant 0 : i32
    %c0_i32_0 = arith.constant 0 : i32
    return %arg0, %c0_i32 : i32, i32
  }
  func.func @transform_1(%arg0: i32) -> (i32, i32) {
    %c0_i32 = arith.constant 0 : i32
    %c0_i32_0 = arith.constant 0 : i32
    %c0_i32_1 = arith.constant 0 : i32
    return %c0_i32, %c0_i32_0 : i32, i32
  }
  func.func @transform_2(%arg0: i32) -> (i32, i32) {
    %c0_i32 = arith.constant 0 : i32
    %c0_i32_0 = arith.constant 0 : i32
    %c0_i32_1 = arith.constant 0 : i32
    return %c0_i32, %c0_i32_0 : i32, i32
  }
  func.func @transform_3(%arg0: i32) -> (i32, i32) {
    %c0_i32 = arith.constant 0 : i32
    %c0_i32_0 = arith.constant 0 : i32
    %c0_i32_1 = arith.constant 0 : i32
    return %c0_i32, %c0_i32_0 : i32, i32
  }
  func.func @transform_4(%arg0: i32) -> (i32, i32) {
    %c0_i32 = arith.constant 0 : i32
    %c0_i32_0 = arith.constant 0 : i32
    %c0_i32_1 = arith.constant 0 : i32
    return %c0_i32, %c0_i32_0 : i32, i32
  }
  func.func @transform_5(%arg0: i32) -> (i32, i32) {
    %c0_i32 = arith.constant 0 : i32
    %c0_i32_0 = arith.constant 0 : i32
    %c0_i32_1 = arith.constant 0 : i32
    return %c0_i32, %c0_i32_0 : i32, i32
  }
  func.func @transform_6(%arg0: i32) -> (i32, i32) {
    %c0_i32 = arith.constant 0 : i32
    %c0_i32_0 = arith.constant 0 : i32
    %c0_i32_1 = arith.constant 0 : i32
    return %c0_i32, %c0_i32_0 : i32, i32
  }
  func.func @transform_7(%arg0: i32) -> (i32, i32) {
    %c0_i32 = arith.constant 0 : i32
    %c0_i32_0 = arith.constant 0 : i32
    return %arg0, %c0_i32 : i32, i32
  }
}

module attributes {stable_mosaic.version = 11 : i64} {
  func.func @kernel(%arg0: i32, %arg1: memref<256x128xf32, #tpu.memory_space<vmem>>, %arg2: memref<128x128xbf16, #tpu.memory_space<vmem>>, %arg3: memref<1x128xf32, #tpu.memory_space<vmem>>, %arg4: memref<128x128xbf16, #tpu.memory_space<vmem>>, %arg5: memref<1x128xf32, #tpu.memory_space<vmem>>, %arg6: memref<128x128xbf16, #tpu.memory_space<vmem>>, %arg7: memref<1x128xf32, #tpu.memory_space<vmem>>, %arg8: memref<256x128xf32, #tpu.memory_space<vmem>>) attributes {dimension_semantics = [#tpu.dimension_semantics<parallel>], iteration_bounds = array<i64: 2>, scalar_prefetch = 0 : i64, scratch_operands = 0 : i64, tpu.core_type = #tpu.core_type<tc>, window_params = [{transform_indices = @transform_0, window_bounds = array<i64: 256, 128>}, {pipeline_mode = #tpu.pipeline_mode<synchronous>, transform_indices = @transform_1, window_bounds = array<i64: 128, 128>}, {pipeline_mode = #tpu.pipeline_mode<synchronous>, transform_indices = @transform_2, window_bounds = array<i64: 1, 128>}, {pipeline_mode = #tpu.pipeline_mode<synchronous>, transform_indices = @transform_3, window_bounds = array<i64: 128, 128>}, {pipeline_mode = #tpu.pipeline_mode<synchronous>, transform_indices = @transform_4, window_bounds = array<i64: 1, 128>}, {pipeline_mode = #tpu.pipeline_mode<synchronous>, transform_indices = @transform_5, window_bounds = array<i64: 128, 128>}, {pipeline_mode = #tpu.pipeline_mode<synchronous>, transform_indices = @transform_6, window_bounds = array<i64: 1, 128>}, {transform_indices = @transform_7, window_bounds = array<i64: 256, 128>}]} {
    %c0 = arith.constant 0 : index
    %c0_0 = arith.constant 0 : index
    %0 = vector.load %arg1[%c0, %c0_0] : memref<256x128xf32, #tpu.memory_space<vmem>>, vector<256x128xf32>
    %c0_1 = arith.constant 0 : index
    %c0_2 = arith.constant 0 : index
    %1 = vector.load %arg2[%c0_1, %c0_2] : memref<128x128xbf16, #tpu.memory_space<vmem>>, vector<128x128xbf16>
    %c0_3 = arith.constant 0 : index
    %c0_4 = arith.constant 0 : index
    %2 = vector.load %arg3[%c0_3, %c0_4] : memref<1x128xf32, #tpu.memory_space<vmem>>, vector<1x128xf32>
    %3 = arith.truncf %0 : vector<256x128xf32> to vector<256x128xbf16>
    %cst = arith.constant dense<0.000000e+00> : vector<256x128xf32>
    %4 = tpu.matmul %3, %1, %cst {dimension_numbers = #tpu.dot_dimension_numbers<[1], [0], [0], [1], [0, 0, 1, 1], [], []>} : vector<256x128xbf16>, vector<128x128xbf16>, vector<256x128xf32> -> vector<256x128xf32>
    %5 = vector.broadcast %2 : vector<1x128xf32> to vector<256x128xf32>
    %6 = arith.addf %4, %5 : vector<256x128xf32>
    %cst_5 = arith.constant 0.000000e+00 : f32
    %7 = vector.broadcast %cst_5 : f32 to vector<256x128xf32>
    %8 = arith.maximumf %6, %7 : vector<256x128xf32>
    %c0_6 = arith.constant 0 : index
    %c0_7 = arith.constant 0 : index
    %9 = vector.load %arg4[%c0_6, %c0_7] : memref<128x128xbf16, #tpu.memory_space<vmem>>, vector<128x128xbf16>
    %c0_8 = arith.constant 0 : index
    %c0_9 = arith.constant 0 : index
    %10 = vector.load %arg5[%c0_8, %c0_9] : memref<1x128xf32, #tpu.memory_space<vmem>>, vector<1x128xf32>
    %11 = arith.truncf %8 : vector<256x128xf32> to vector<256x128xbf16>
    %cst_10 = arith.constant dense<0.000000e+00> : vector<256x128xf32>
    %12 = tpu.matmul %11, %9, %cst_10 {dimension_numbers = #tpu.dot_dimension_numbers<[1], [0], [0], [1], [0, 0, 1, 1], [], []>} : vector<256x128xbf16>, vector<128x128xbf16>, vector<256x128xf32> -> vector<256x128xf32>
    %13 = vector.broadcast %10 : vector<1x128xf32> to vector<256x128xf32>
    %14 = arith.addf %12, %13 : vector<256x128xf32>
    %cst_11 = arith.constant 0.000000e+00 : f32
    %15 = vector.broadcast %cst_11 : f32 to vector<256x128xf32>
    %16 = arith.maximumf %14, %15 : vector<256x128xf32>
    %c0_12 = arith.constant 0 : index
    %c0_13 = arith.constant 0 : index
    %17 = vector.load %arg6[%c0_12, %c0_13] : memref<128x128xbf16, #tpu.memory_space<vmem>>, vector<128x128xbf16>
    %c0_14 = arith.constant 0 : index
    %c0_15 = arith.constant 0 : index
    %18 = vector.load %arg7[%c0_14, %c0_15] : memref<1x128xf32, #tpu.memory_space<vmem>>, vector<1x128xf32>
    %19 = arith.truncf %16 : vector<256x128xf32> to vector<256x128xbf16>
    %cst_16 = arith.constant dense<0.000000e+00> : vector<256x128xf32>
    %20 = tpu.matmul %19, %17, %cst_16 {dimension_numbers = #tpu.dot_dimension_numbers<[1], [0], [0], [1], [0, 0, 1, 1], [], []>} : vector<256x128xbf16>, vector<128x128xbf16>, vector<256x128xf32> -> vector<256x128xf32>
    %21 = vector.broadcast %18 : vector<1x128xf32> to vector<256x128xf32>
    %22 = arith.addf %20, %21 : vector<256x128xf32>
    %c0_17 = arith.constant 0 : index
    %c0_18 = arith.constant 0 : index
    %23 = vector.load %arg8[%c0_17, %c0_18] : memref<256x128xf32, #tpu.memory_space<vmem>>, vector<256x128xf32>
    tpu.vector_store %arg8[%c0_17, %c0_18], %22 {strides = array<i32>} : memref<256x128xf32, #tpu.memory_space<vmem>>, vector<256x128xf32>,
    return
  }
  func.func @transform_0(%arg0: i32) -> (i32, i32) {
    %c0_i32 = arith.constant 0 : i32
    %c0_i32_0 = arith.constant 0 : i32
    return %arg0, %c0_i32 : i32, i32
  }
  func.func @transform_1(%arg0: i32) -> (i32, i32) {
    %c0_i32 = arith.constant 0 : i32
    %c0_i32_0 = arith.constant 0 : i32
    %c0_i32_1 = arith.constant 0 : i32
    return %c0_i32, %c0_i32_0 : i32, i32
  }
  func.func @transform_2(%arg0: i32) -> (i32, i32) {
    %c0_i32 = arith.constant 0 : i32
    %c0_i32_0 = arith.constant 0 : i32
    %c0_i32_1 = arith.constant 0 : i32
    return %c0_i32, %c0_i32_0 : i32, i32
  }
  func.func @transform_3(%arg0: i32) -> (i32, i32) {
    %c0_i32 = arith.constant 0 : i32
    %c0_i32_0 = arith.constant 0 : i32
    %c0_i32_1 = arith.constant 0 : i32
    return %c0_i32, %c0_i32_0 : i32, i32
  }
  func.func @transform_4(%arg0: i32) -> (i32, i32) {
    %c0_i32 = arith.constant 0 : i32
    %c0_i32_0 = arith.constant 0 : i32
    %c0_i32_1 = arith.constant 0 : i32
    return %c0_i32, %c0_i32_0 : i32, i32
  }
  func.func @transform_5(%arg0: i32) -> (i32, i32) {
    %c0_i32 = arith.constant 0 : i32
    %c0_i32_0 = arith.constant 0 : i32
    %c0_i32_1 = arith.constant 0 : i32
    return %c0_i32, %c0_i32_0 : i32, i32
  }
  func.func @transform_6(%arg0: i32) -> (i32, i32) {
    %c0_i32 = arith.constant 0 : i32
    %c0_i32_0 = arith.constant 0 : i32
    %c0_i32_1 = arith.constant 0 : i32
    return %c0_i32, %c0_i32_0 : i32, i32
  }
  func.func @transform_7(%arg0: i32) -> (i32, i32) {
    %c0_i32 = arith.constant 0 : i32
    %c0_i32_0 = arith.constant 0 : i32
    return %arg0, %c0_i32 : i32, i32
  }
}

</mosaic_0001>

<llo_original>
// kernel: tpu_custom_call.1
$region0: #{tpu_custom_call.1}
  #allocation0 [shape = 'u32[]', space=smem, size = 0x4, offset = 0x4, fixed_abs, tag = 'smem constant byte address 0x4 - core index']
  #allocation1 [shape = 'u32[144,128]{1,0:T(1,128)}', space=vmem, size = 0x12000, scoped, tag = 'internal scratch']
  %s0 = inlined_call_operand.hbm [shape: f32[512,128], index: 0, kind: input, shape index: {}]
  %s1 = inlined_call_operand.hbm [shape: bf16[128,128], index: 1, kind: input, shape index: {}]
  %s2 = inlined_call_operand.vmem [shape: f32[1,128], index: 2, kind: input, shape index: {}]
  %s3 = inlined_call_operand.hbm [shape: bf16[128,128], index: 3, kind: input, shape index: {}]
  %s4 = inlined_call_operand.vmem [shape: f32[1,128], index: 4, kind: input, shape index: {}]
  %s5 = inlined_call_operand.hbm [shape: bf16[128,128], index: 5, kind: input, shape index: {}]
  %s6 = inlined_call_operand.vmem [shape: f32[1,128], index: 6, kind: input, shape index: {}]
  %s7 = inlined_call_operand.hbm [shape: f32[512,128], index: 7, kind: output, shape index: {}]
  %s8 = sld [smem:[#allocation0]]
  $region77: #{tpu_custom_call.1} parent=0
    _
  %s10 = ssub.s32 1, %s8
  %s11 = scalar_select 0, %s10, %s8
  $region1: #{tpu_custom_call.1} parent=0
    #allocation2 [shape = 'u8[262144]{0}', space=vmem, size = 0x40000, scoped, tag = 'input window, operand 0']
    #allocation3 [shape = 's32[2]{0}', space=sflag, size = 0x8, scoped, tag = 'scoped memory for tpu_custom_call.1']
    #allocation4 [shape = 's32[2]{0}', space=sflag, size = 0x8, scoped, tag = 'scoped memory for tpu_custom_call.1']
    #allocation5 [shape = 'u8[32768]{0}', space=vmem, size = 0x8000, scoped, tag = 'input window, operand 1, single buffered']
    #allocation6 [shape = 's32[1]{0}', space=sflag, size = 0x4, scoped, tag = 'scoped memory for tpu_custom_call.1']
    #allocation7 [shape = 'u8[32768]{0}', space=vmem, size = 0x8000, scoped, tag = 'input window, operand 3, single buffered']
    #allocation8 [shape = 'u8[32768]{0}', space=vmem, size = 0x8000, scoped, tag = 'input window, operand 5, single buffered']
    #allocation9 [shape = 's32[1]{0}', space=sflag, size = 0x4, scoped, tag = 'scoped memory for tpu_custom_call.1']
    #allocation10 [shape = 'u8[262144]{0}', space=vmem, size = 0x40000, scoped, tag = 'output window, operand 0']
    %12 = vsyncpa [#allocation3], 0
    %s13 = scalar_lea.sflag [#allocation3], 1
    %14 = vsyncpa %s13, 0
    %15 = vsyncpa [#allocation6], 0
    %16 = vsyncpa [#allocation9], 0
    %17 = vsyncpa [#allocation4], 0
    %s18 = scalar_lea.sflag [#allocation4], 1
    %19 = vsyncpa %s18, 0
    loop: start=0, step=1, limit=4
    $region2: #{tpu_custom_call.1} parent=1 // loop_pre_header
      _
    $region3: #{tpu_custom_call.1} parent=1 // loop_header
      %s21 = sphi 0, %s25
      %p22 = scmp.ge.s32.totalorder %s21, 4
      %s31 = sphi 0, %s33
      %s34 = sphi 0, %s31
      %s35 = sphi 0, %s34
      %s51 = sphi 0, %s35
      %s55 = sphi 0, %s55
      %s57 = sphi 0, %s55
      %s58 = sphi 0, %s57
      %s72 = sphi 0, %s58
      %s76 = sphi 0, %s76
      %s78 = sphi 0, %s76
      %s79 = sphi 0, %s78
      %s93 = sphi 0, %s79
      %s97 = sphi 0, %s97
      %s99 = sphi 0, %s97
      %s100 = sphi 0, %s99
      %s114 = sphi 0, %s100
      %s118 = sphi 0, %s118
      %s120 = sphi 0, %s118
      %s121 = sphi 0, %s120
      %s135 = sphi 0, %s121
      %s139 = sphi 0, %s139
      %s141 = sphi 0, %s139
      %s142 = sphi 0, %s141
      %s156 = sphi 0, %s142
      %s160 = sphi 0, %s160
      %s162 = sphi 0, %s160
      %s163 = sphi 0, %s162
      %s177 = sphi 0, %s163
      %s183 = sphi 0, %s185
      %s186 = sphi 0, %s183
      %s187 = sphi 0, %s186
      %s203 = sphi 0, %s187
    $region4: #{tpu_custom_call.1} parent=1 // loop_header_branch
      %24 = sbr.rel (%p22) target = $region8
    $region5: #{tpu_custom_call.1} parent=1 // loop_body
      %s26 = ssub.s32 %s21, 1
      %s27 = ssub.s32 %s21, 2
      %s28 = sadd.s32 %s21, 1
      %s29 = ssub.s32 %s21, %s28
      %p30 = scmp.eq.s32.totalorder %s29, 0
      %s32 = sadd.s32 %s31, 1
      %s33 = scalar_select %p30, %s31, %s32
      %p36 = pneg %p30
      %p37 = scmp.eq.s32.totalorder %s21, 1
      %p38 = por %p36, %p37
      %p39 = scmp.ne.s32.totalorder %s31, %s34
      %p40 = scmp.eq.s32.totalorder %s21, 0
      %p41 = por %p39, %p40
      %p42 = scmp.ne.s32.totalorder %s31, %s34
      %p43 = scmp.eq.s32.totalorder %s26, 1
      %p44 = por %p42, %p43
      %p45 = scmp.ne.s32.totalorder %s34, %s35
      %p46 = scmp.eq.s32.totalorder %s26, 0
      %p47 = por %p45, %p46
      %p48 = scmp.ne.s32.totalorder %s34, %s35
      %p49 = scmp.eq.s32.totalorder %s27, 1
      %p50 = por %p48, %p49
      %p52 = scmp.ne.s32.totalorder %s35, %s51
      %p53 = scmp.eq.s32.totalorder %s27, 0
      %p54 = por %p52, %p53
      %s56 = sadd.s32 %s55, 1
      %p59 = scmp.eq.s32.totalorder %s21, 1
      %p60 = scmp.ne.s32.totalorder %s55, %s57
      %p61 = scmp.eq.s32.totalorder %s21, 0
      %p62 = por %p60, %p61
      %p63 = scmp.ne.s32.totalorder %s55, %s57
      %p64 = scmp.eq.s32.totalorder %s26, 1
      %p65 = por %p63, %p64
      %p66 = scmp.ne.s32.totalorder %s57, %s58
      %p67 = scmp.eq.s32.totalorder %s26, 0
      %p68 = por %p66, %p67
      %p69 = scmp.ne.s32.totalorder %s57, %s58
      %p70 = scmp.eq.s32.totalorder %s27, 1
      %p71 = por %p69, %p70
      %p73 = scmp.ne.s32.totalorder %s58, %s72
      %p74 = scmp.eq.s32.totalorder %s27, 0
      %p75 = por %p73, %p74
      %s77 = sadd.s32 %s76, 1
      %p80 = scmp.eq.s32.totalorder %s21, 1
      %p81 = scmp.ne.s32.totalorder %s76, %s78
      %p82 = scmp.eq.s32.totalorder %s21, 0
      %p83 = por %p81, %p82
      %p84 = scmp.ne.s32.totalorder %s76, %s78
      %p85 = scmp.eq.s32.totalorder %s26, 1
      %p86 = por %p84, %p85
      %p87 = scmp.ne.s32.totalorder %s78, %s79
      %p88 = scmp.eq.s32.totalorder %s26, 0
      %p89 = por %p87, %p88
      %p90 = scmp.ne.s32.totalorder %s78, %s79
      %p91 = scmp.eq.s32.totalorder %s27, 1
      %p92 = por %p90, %p91
      %p94 = scmp.ne.s32.totalorder %s79, %s93
      %p95 = scmp.eq.s32.totalorder %s27, 0
      %p96 = por %p94, %p95
      %s98 = sadd.s32 %s97, 1
      %p101 = scmp.eq.s32.totalorder %s21, 1
      %p102 = scmp.ne.s32.totalorder %s97, %s99
      %p103 = scmp.eq.s32.totalorder %s21, 0
      %p104 = por %p102, %p103
      %p105 = scmp.ne.s32.totalorder %s97, %s99
      %p106 = scmp.eq.s32.totalorder %s26, 1
      %p107 = por %p105, %p106
      %p108 = scmp.ne.s32.totalorder %s99, %s100
      %p109 = scmp.eq.s32.totalorder %s26, 0
      %p110 = por %p108, %p109
      %p111 = scmp.ne.s32.totalorder %s99, %s100
      %p112 = scmp.eq.s32.totalorder %s27, 1
      %p113 = por %p111, %p112
      %p115 = scmp.ne.s32.totalorder %s100, %s114
      %p116 = scmp.eq.s32.totalorder %s27, 0
      %p117 = por %p115, %p116
      %s119 = sadd.s32 %s118, 1
      %p122 = scmp.eq.s32.totalorder %s21, 1
      %p123 = scmp.ne.s32.totalorder %s118, %s120
      %p124 = scmp.eq.s32.totalorder %s21, 0
      %p125 = por %p123, %p124
      %p126 = scmp.ne.s32.totalorder %s118, %s120
      %p127 = scmp.eq.s32.totalorder %s26, 1
      %p128 = por %p126, %p127
      %p129 = scmp.ne.s32.totalorder %s120, %s121
      %p130 = scmp.eq.s32.totalorder %s26, 0
      %p131 = por %p129, %p130
      %p132 = scmp.ne.s32.totalorder %s120, %s121
      %p133 = scmp.eq.s32.totalorder %s27, 1
      %p134 = por %p132, %p133
      %p136 = scmp.ne.s32.totalorder %s121, %s135
      %p137 = scmp.eq.s32.totalorder %s27, 0
      %p138 = por %p136, %p137
      %s140 = sadd.s32 %s139, 1
      %p143 = scmp.eq.s32.totalorder %s21, 1
      %p144 = scmp.ne.s32.totalorder %s139, %s141
      %p145 = scmp.eq.s32.totalorder %s21, 0
      %p146 = por %p144, %p145
      %p147 = scmp.ne.s32.totalorder %s139, %s141
      %p148 = scmp.eq.s32.totalorder %s26, 1
      %p149 = por %p147, %p148
      %p150 = scmp.ne.s32.totalorder %s141, %s142
      %p151 = scmp.eq.s32.totalorder %s26, 0
      %p152 = por %p150, %p151
      %p153 = scmp.ne.s32.totalorder %s141, %s142
      %p154 = scmp.eq.s32.totalorder %s27, 1
      %p155 = por %p153, %p154
      %p157 = scmp.ne.s32.totalorder %s142, %s156
      %p158 = scmp.eq.s32.totalorder %s27, 0
      %p159 = por %p157, %p158
      %s161 = sadd.s32 %s160, 1
      %p164 = scmp.eq.s32.totalorder %s21, 1
      %p165 = scmp.ne.s32.totalorder %s160, %s162
      %p166 = scmp.eq.s32.totalorder %s21, 0
      %p167 = por %p165, %p166
      %p168 = scmp.ne.s32.totalorder %s160, %s162
      %p169 = scmp.eq.s32.totalorder %s26, 1
      %p170 = por %p168, %p169
      %p171 = scmp.ne.s32.totalorder %s162, %s163
      %p172 = scmp.eq.s32.totalorder %s26, 0
      %p173 = por %p171, %p172
      %p174 = scmp.ne.s32.totalorder %s162, %s163
      %p175 = scmp.eq.s32.totalorder %s27, 1
      %p176 = por %p174, %p175
      %p178 = scmp.ne.s32.totalorder %s163, %s177
      %p179 = scmp.eq.s32.totalorder %s27, 0
      %p180 = por %p178, %p179
      %s181 = ssub.s32 %s21, %s28
      %p182 = scmp.eq.s32.totalorder %s181, 0
      %s184 = sadd.s32 %s183, 1
      %s185 = scalar_select %p182, %s183, %s184
      %p188 = pneg %p182
      %p189 = scmp.eq.s32.totalorder %s21, 1
      %p190 = por %p188, %p189
      %p191 = scmp.ne.s32.totalorder %s183, %s186
      %p192 = scmp.eq.s32.totalorder %s21, 0
      %p193 = por %p191, %p192
      %p194 = scmp.ne.s32.totalorder %s183, %s186
      %p195 = scmp.eq.s32.totalorder %s26, 1
      %p196 = por %p194, %p195
      %p197 = scmp.ne.s32.totalorder %s186, %s187
      %p198 = scmp.eq.s32.totalorder %s26, 0
      %p199 = por %p197, %p198
      %p200 = scmp.ne.s32.totalorder %s186, %s187
      %p201 = scmp.eq.s32.totalorder %s27, 1
      %p202 = por %p200, %p201
      %p204 = scmp.ne.s32.totalorder %s187, %s203
      %p205 = scmp.eq.s32.totalorder %s27, 0
      %p206 = por %p204, %p205
      %p207 = scmp.le.s32.totalorder 1, %s21
      %p208 = scmp.lt.s32.totalorder %s21, 3
      %p209 = pnand %p207, %p208
      %p210 = pneg %p209
      // Predicated region
      $region9: #{tpu_custom_call.1} parent=5 // pred_check
        _
      $region10: #{tpu_custom_call.1} parent=5 // pred_check_branch
        %212 = sbr.rel (%p209) target = $region12
      $region11: #{tpu_custom_call.1} parent=5 // pred_region
        %s213 = ssub.s32 %s21, 1
        // Predicated region
        $region13: #{tpu_custom_call.1} parent=11 // pred_check
          %p214 = pneg %p68
        $region14: #{tpu_custom_call.1} parent=11 // pred_check_branch
          %216 = sbr.rel (%p214) target = $region16
        $region15: #{tpu_custom_call.1} parent=11 // pred_region
          %s218 = ssub.s32 1024, 1024
          %219 = vsyncadd [#allocation6], %s218
          %s220 = sshll.u32 [#allocation5], 4
          %s221 = int_to_ptr.vmem [resolvable:$true] %s220
          %226 = dma.hbm_to_vmem [thread:$0]  %s1, 1024, %s221, [#allocation6], 64, 64, 4
        $region16: #{tpu_custom_call.1} parent=11 // pred_fallthru
          _
        // Predicated region
        $region17: #{tpu_custom_call.1} parent=11 // pred_check
          %p227 = pneg %p89
        $region18: #{tpu_custom_call.1} parent=11 // pred_check_branch
          %229 = sbr.rel (%p227) target = $region20
        $region19: #{tpu_custom_call.1} parent=11 // pred_region
          _
        $region20: #{tpu_custom_call.1} parent=11 // pred_fallthru
          _
        // Predicated region
        $region21: #{tpu_custom_call.1} parent=11 // pred_check
          %p230 = pneg %p110
        $region22: #{tpu_custom_call.1} parent=11 // pred_check_branch
          %232 = sbr.rel (%p230) target = $region24
        $region23: #{tpu_custom_call.1} parent=11 // pred_region
          %s234 = ssub.s32 1024, 1024
          %235 = vsyncadd [#allocation6], %s234
          %s236 = sshll.u32 [#allocation7], 4
          %s237 = int_to_ptr.vmem [resolvable:$true] %s236
          %242 = dma.hbm_to_vmem [thread:$0]  %s3, 1024, %s237, [#allocation6], 64, 64, 4
        $region24: #{tpu_custom_call.1} parent=11 // pred_fallthru
          _
        // Predicated region
        $region25: #{tpu_custom_call.1} parent=11 // pred_check
          %p243 = pneg %p131
        $region26: #{tpu_custom_call.1} parent=11 // pred_check_branch
          %245 = sbr.rel (%p243) target = $region28
        $region27: #{tpu_custom_call.1} parent=11 // pred_region
          _
        $region28: #{tpu_custom_call.1} parent=11 // pred_fallthru
          _
        // Predicated region
        $region29: #{tpu_custom_call.1} parent=11 // pred_check
          %p246 = pneg %p152
        $region30: #{tpu_custom_call.1} parent=11 // pred_check_branch
          %248 = sbr.rel (%p246) target = $region32
        $region31: #{tpu_custom_call.1} parent=11 // pred_region
          %s250 = ssub.s32 1024, 1024
          %251 = vsyncadd [#allocation9], %s250
          %s252 = sshll.u32 [#allocation8], 4
          %s253 = int_to_ptr.vmem [resolvable:$true] %s252
          %258 = dma.hbm_to_vmem [thread:$0]  %s5, 1024, %s253, [#allocation9], 64, 64, 4
        $region32: #{tpu_custom_call.1} parent=11 // pred_fallthru
          _
        // Predicated region
        $region33: #{tpu_custom_call.1} parent=11 // pred_check
          %p259 = pneg %p173
        $region34: #{tpu_custom_call.1} parent=11 // pred_check_branch
          %261 = sbr.rel (%p259) target = $region36
        $region35: #{tpu_custom_call.1} parent=11 // pred_region
          _
        $region36: #{tpu_custom_call.1} parent=11 // pred_fallthru
          _
      $region12: #{tpu_custom_call.1} parent=5 // pred_fallthru
        _
      %p262 = scmp.lt.s32.totalorder %s21, 2
      // Predicated region
      $region37: #{tpu_custom_call.1} parent=5 // pred_check
        %p263 = pneg %p262
      $region38: #{tpu_custom_call.1} parent=5 // pred_check_branch
        %265 = sbr.rel (%p263) target = $region40
      $region39: #{tpu_custom_call.1} parent=5 // pred_region
        // Predicated region
        $region41: #{tpu_custom_call.1} parent=39 // pred_check
          %p266 = pneg %p41
        $region42: #{tpu_custom_call.1} parent=39 // pred_check_branch
          %268 = sbr.rel (%p266) target = $region44
        $region43: #{tpu_custom_call.1} parent=39 // pred_region
          %s269 = sand.u32 %s31, 1
          %s270 = scalar_lea.sflag [#allocation3], %s269
          %s271 = sand.u32 %s31, 1
          %s272 = smul.addr %s271, 256
          %s273 = scalar_lea.vmem [#allocation2], %s272
          %s274 = smul.u32 32, %s21
          %s276 = ssub.s32 4096, 4096
          %277 = vsyncadd %s270, %s276
          %s278 = smul.addr %s274, 128
          %s279 = scalar_lea.hbm %s0, %s278
          %s280 = sshll.u32 %s273, 4
          %s281 = int_to_ptr.vmem [resolvable:$true] %s280
          %286 = dma.hbm_to_vmem [thread:$0]  %s279, 4096, %s281, %s270, 128, 128, 8
        $region44: #{tpu_custom_call.1} parent=39 // pred_fallthru
          _
      $region40: #{tpu_custom_call.1} parent=5 // pred_fallthru
        _
      %p287 = scmp.le.s32.totalorder 1, %s21
      %p288 = scmp.lt.s32.totalorder %s21, 3
      %p289 = pnand %p287, %p288
      %p290 = pneg %p289
      // Predicated region
      $region45: #{tpu_custom_call.1} parent=5 // pred_check
        _
      $region46: #{tpu_custom_call.1} parent=5 // pred_check_branch
        %292 = sbr.rel (%p289) target = $region48
      $region47: #{tpu_custom_call.1} parent=5 // pred_region
        %s293 = ssub.s32 %s21, 1
        %s294 = sand.u32 %s34, 1
        %s295 = scalar_lea.sflag [#allocation3], %s294
        %s296 = sand.u32 %s34, 1
        %s297 = smul.addr %s296, 256
        %s298 = scalar_lea.vmem [#allocation2], %s297
        // Predicated region
        $region49: #{tpu_custom_call.1} parent=47 // pred_check
          %p299 = pneg %p47
        $region50: #{tpu_custom_call.1} parent=47 // pred_check_branch
          %301 = sbr.rel (%p299) target = $region52
        $region51: #{tpu_custom_call.1} parent=47 // pred_region
          %302 = dma.done %s295, 4096
        $region52: #{tpu_custom_call.1} parent=47 // pred_fallthru
          _
        // Predicated region
        $region53: #{tpu_custom_call.1} parent=47 // pred_check
          %p303 = pneg %p68
        $region54: #{tpu_custom_call.1} parent=47 // pred_check_branch
          %305 = sbr.rel (%p303) target = $region56
        $region55: #{tpu_custom_call.1} parent=47 // pred_region
          %306 = dma.done [#allocation6], 1024
        $region56: #{tpu_custom_call.1} parent=47 // pred_fallthru
          _
        // Predicated region
        $region57: #{tpu_custom_call.1} parent=47 // pred_check
          %p307 = pneg %p110
        $region58: #{tpu_custom_call.1} parent=47 // pred_check_branch
          %309 = sbr.rel (%p307) target = $region60
        $region59: #{tpu_custom_call.1} parent=47 // pred_region
          %310 = dma.done [#allocation6], 1024
        $region60: #{tpu_custom_call.1} parent=47 // pred_fallthru
          _
        // Predicated region
        $region61: #{tpu_custom_call.1} parent=47 // pred_check
          %p311 = pneg %p152
        $region62: #{tpu_custom_call.1} parent=47 // pred_check_branch
          %313 = sbr.rel (%p311) target = $region64
        $region63: #{tpu_custom_call.1} parent=47 // pred_region
          %314 = dma.done [#allocation9], 1024
        $region64: #{tpu_custom_call.1} parent=47 // pred_fallthru
          _
        %s315 = sand.u32 %s34, 1
        %s316 = scalar_lea.sflag [#allocation3], %s315
        %s317 = sand.u32 %s34, 1
        %s318 = smul.addr %s317, 256
        %s319 = scalar_lea.vmem [#allocation2], %s318
        %p320 = pneg %p47
        %p321 = pneg %p44
        %p322 = pneg %p68
        %p323 = pneg %p65
        %p324 = pneg %p89
        %p325 = pneg %p86
        %p326 = pneg %p110
        %p327 = pneg %p107
        %p328 = pneg %p131
        %p329 = pneg %p128
        %p330 = pneg %p152
        %p331 = pneg %p149
        %p332 = pneg %p173
        %p333 = pneg %p170
        %p334 = pneg %p199
        %p335 = pneg %p196
        %s336 = sand.u32 %s186, 1
        %s337 = scalar_lea.sflag [#allocation4], %s336
        %s338 = sand.u32 %s186, 1
        %s339 = smul.addr %s338, 256
        %s340 = scalar_lea.vmem [#allocation10], %s339
        %s341 = smul.u32 32, %s26
        %s342 = smul.u32 32, %s26
        %v344 = vld [vmem:[%s298] sm:$0xff]
        %v345 = vld [vmem:[%s298 + $0x8] sm:$0xff]
        %v346 = vld [vmem:[%s298 + $0x10] sm:$0xff]
        %v347 = vld [vmem:[%s298 + $0x18] sm:$0xff]
        %v348 = vld [vmem:[%s298 + $0x20] sm:$0xff]
        %v349 = vld [vmem:[%s298 + $0x28] sm:$0xff]
        %v350 = vld [vmem:[%s298 + $0x30] sm:$0xff]
        %v351 = vld [vmem:[%s298 + $0x38] sm:$0xff]
        %v352 = vld [vmem:[%s298 + $0x40] sm:$0xff]
        %v353 = vld [vmem:[%s298 + $0x48] sm:$0xff]
        %v354 = vld [vmem:[%s298 + $0x50] sm:$0xff]
        %v355 = vld [vmem:[%s298 + $0x58] sm:$0xff]
        %v356 = vld [vmem:[%s298 + $0x60] sm:$0xff]
        %v357 = vld [vmem:[%s298 + $0x68] sm:$0xff]
        %v358 = vld [vmem:[%s298 + $0x70] sm:$0xff]
        %v359 = vld [vmem:[%s298 + $0x78] sm:$0xff]
        %v360 = vld [vmem:[%s298 + $0x80] sm:$0xff]
        %v361 = vld [vmem:[%s298 + $0x88] sm:$0xff]
        %v362 = vld [vmem:[%s298 + $0x90] sm:$0xff]
        %v363 = vld [vmem:[%s298 + $0x98] sm:$0xff]
        %v364 = vld [vmem:[%s298 + $0xa0] sm:$0xff]
        %v365 = vld [vmem:[%s298 + $0xa8] sm:$0xff]
        %v366 = vld [vmem:[%s298 + $0xb0] sm:$0xff]
        %v367 = vld [vmem:[%s298 + $0xb8] sm:$0xff]
        %v368 = vld [vmem:[%s298 + $0xc0] sm:$0xff]
        %v369 = vld [vmem:[%s298 + $0xc8] sm:$0xff]
        %v370 = vld [vmem:[%s298 + $0xd0] sm:$0xff]
        %v371 = vld [vmem:[%s298 + $0xd8] sm:$0xff]
        %v372 = vld [vmem:[%s298 + $0xe0] sm:$0xff]
        %v373 = vld [vmem:[%s298 + $0xe8] sm:$0xff]
        %v374 = vld [vmem:[%s298 + $0xf0] sm:$0xff]
        %v375 = vld [vmem:[%s298 + $0xf8] sm:$0xff]
        %v376 = vld [vmem:[#allocation5] sm:$0xf]
        %v377 = vld [vmem:[#allocation5 + $0x4] sm:$0xf]
        %v378 = vld [vmem:[#allocation5 + $0x8] sm:$0xf]
        %v379 = vld [vmem:[#allocation5 + $0xc] sm:$0xf]
        %v380 = vld [vmem:[#allocation5 + $0x10] sm:$0xf]
        %v381 = vld [vmem:[#allocation5 + $0x14] sm:$0xf]
        %v382 = vld [vmem:[#allocation5 + $0x18] sm:$0xf]
        %v383 = vld [vmem:[#allocation5 + $0x1c] sm:$0xf]
        %v384 = vld [vmem:[#allocation5 + $0x20] sm:$0xf]
        %v385 = vld [vmem:[#allocation5 + $0x24] sm:$0xf]
        %v386 = vld [vmem:[#allocation5 + $0x28] sm:$0xf]
        %v387 = vld [vmem:[#allocation5 + $0x2c] sm:$0xf]
        %v388 = vld [vmem:[#allocation5 + $0x30] sm:$0xf]
        %v389 = vld [vmem:[#allocation5 + $0x34] sm:$0xf]
        %v390 = vld [vmem:[#allocation5 + $0x38] sm:$0xf]
        %v391 = vld [vmem:[#allocation5 + $0x3c] sm:$0xf]
        %v392 = vld [vmem:[%s2] sm:$0x1]
        %v393 = vpack.c.bf16 %v345, %v344
        %v394 = vpack.c.bf16 %v347, %v346
        %v395 = vpack.c.bf16 %v349, %v348
        %v396 = vpack.c.bf16 %v351, %v350
        %v397 = vpack.c.bf16 %v353, %v352
        %v398 = vpack.c.bf16 %v355, %v354
        %v399 = vpack.c.bf16 %v357, %v356
        %v400 = vpack.c.bf16 %v359, %v358
        %v401 = vpack.c.bf16 %v361, %v360
        %v402 = vpack.c.bf16 %v363, %v362
        %v403 = vpack.c.bf16 %v365, %v364
        %v404 = vpack.c.bf16 %v367, %v366
        %v405 = vpack.c.bf16 %v369, %v368
        %v406 = vpack.c.bf16 %v371, %v370
        %v407 = vpack.c.bf16 %v373, %v372
        %v408 = vpack.c.bf16 %v375, %v374
        %v410 = vlaneseq
        %v411 = vshrl.u32 %v410, 7
        %v412 = vsub.s32 0, %v411
        %v413 = vrot.slane %v392, %v412
        %v431 = vunpack.c.l.b16 %v376
        %v432 = vunpack.c.l.b16 %v377
        %v433 = vunpack.c.l.b16 %v378
        %v434 = vunpack.c.l.b16 %v379
        %v435 = vunpack.c.l.b16 %v380
        %v436 = vunpack.c.l.b16 %v381
        %v437 = vunpack.c.l.b16 %v382
        %v438 = vunpack.c.l.b16 %v383
        %v439 = vunpack.c.l.b16 %v384
        %v440 = vunpack.c.l.b16 %v385
        %v441 = vunpack.c.l.b16 %v386
        %v442 = vunpack.c.l.b16 %v387
        %v443 = vunpack.c.l.b16 %v388
        %v444 = vunpack.c.l.b16 %v389
        %v445 = vunpack.c.l.b16 %v390
        %v446 = vunpack.c.l.b16 %v391
        %v447 = vpack.c.b16 %v432, %v431
        %v448 = vpack.c.b16 %v434, %v433
        %v449 = vpack.c.b16 %v436, %v435
        %v450 = vpack.c.b16 %v438, %v437
        %v451 = vpack.c.b16 %v440, %v439
        %v452 = vpack.c.b16 %v442, %v441
        %v453 = vpack.c.b16 %v444, %v443
        %v454 = vpack.c.b16 %v446, %v445
        %463 = vmatprep.subr.bf16.mxu0 0
        %464 = vmatpush1.bf16.msra.mxu0 %v447
        %465 = vmatprep.subr.bf16.mxu0 0
        %466 = vmatpush1.bf16.msra.mxu0 %v448
        %467 = vmatprep.subr.bf16.mxu0 0
        %468 = vmatpush1.bf16.msra.mxu0 %v449
        %469 = vmatprep.subr.bf16.mxu0 0
        %470 = vmatpush1.bf16.msra.mxu0 %v450
        %471 = vmatprep.subr.bf16.mxu0 0
        %472 = vmatpush1.bf16.msra.mxu0 %v451
        %473 = vmatprep.subr.bf16.mxu0 0
        %474 = vmatpush1.bf16.msra.mxu0 %v452
        %475 = vmatprep.subr.bf16.mxu0 0
        %476 = vmatpush1.bf16.msra.mxu0 %v453
        %477 = vmatprep.subr.bf16.mxu0 0
        %478 = vmatpush1.bf16.msra.mxu0 %v454
        %479 = vmatprep.subr.bf16.mxu0 0
        %480 = vmatpush1.bf16.msra.mxu0 0
        %481 = vmatprep.subr.bf16.mxu0 0
        %482 = vmatpush1.bf16.msra.mxu0 0
        %483 = vmatprep.subr.bf16.mxu0 0
        %484 = vmatpush1.bf16.msra.mxu0 0
        %485 = vmatprep.subr.bf16.mxu0 0
        %486 = vmatpush1.bf16.msra.mxu0 0
        %487 = vmatprep.subr.bf16.mxu0 0
        %488 = vmatpush1.bf16.msra.mxu0 0
        %489 = vmatprep.subr.bf16.mxu0 0
        %490 = vmatpush1.bf16.msra.mxu0 0
        %491 = vmatprep.subr.bf16.mxu0 0
        %492 = vmatpush1.bf16.msra.mxu0 0
        %493 = vmatprep.subr.bf16.mxu0 0
        %494 = vmatpush1.bf16.msra.mxu0 0
        %495 = vmatprep.mubr.bf16.mxu0 0
        %496 = vmatmul.mubr.bf16.gmra.mrb[0].mxu0 %v393
        %v497 = vpop.f32.mrb[0].mxu0
        %v498 = vadd.f32 %v413, %v497
        %v499 = vpop.f32.mrb[0].mxu0
        %v500 = vpop.f32.mrb[0].mxu0
        %v501 = vadd.f32 %v413, %v500
        %v502 = vpop.f32.mrb[0].mxu0
        %503 = vmatprep.mubr.bf16.mxu0 0
        %504 = vmatmul.mubr.bf16.gmra.mrb[0].mxu0 %v394
        %v505 = vpop.f32.mrb[0].mxu0
        %v506 = vadd.f32 %v413, %v505
        %v507 = vpop.f32.mrb[0].mxu0
        %v508 = vpop.f32.mrb[0].mxu0
        %v509 = vadd.f32 %v413, %v508
        %v510 = vpop.f32.mrb[0].mxu0
        %511 = vmatprep.mubr.bf16.mxu0 0
        %512 = vmatmul.mubr.bf16.gmra.mrb[0].mxu0 %v395
        %v513 = vpop.f32.mrb[0].mxu0
        %v514 = vadd.f32 %v413, %v513
        %v515 = vpop.f32.mrb[0].mxu0
        %v516 = vpop.f32.mrb[0].mxu0
        %v517 = vadd.f32 %v413, %v516
        %v518 = vpop.f32.mrb[0].mxu0
        %519 = vmatprep.mubr.bf16.mxu0 0
        %520 = vmatmul.mubr.bf16.gmra.mrb[0].mxu0 %v396
        %v521 = vpop.f32.mrb[0].mxu0
        %v522 = vadd.f32 %v413, %v521
        %v523 = vpop.f32.mrb[0].mxu0
        %v524 = vpop.f32.mrb[0].mxu0
        %v525 = vadd.f32 %v413, %v524
        %v526 = vpop.f32.mrb[0].mxu0
        %527 = vmatprep.mubr.bf16.mxu0 0
        %528 = vmatmul.mubr.bf16.gmra.mrb[0].mxu0 %v397
        %v529 = vpop.f32.mrb[0].mxu0
        %v530 = vadd.f32 %v413, %v529
        %v531 = vpop.f32.mrb[0].mxu0
        %v532 = vpop.f32.mrb[0].mxu0
        %v533 = vadd.f32 %v413, %v532
        %v534 = vpop.f32.mrb[0].mxu0
        %535 = vmatprep.mubr.bf16.mxu0 0
        %536 = vmatmul.mubr.bf16.gmra.mrb[0].mxu0 %v398
        %v537 = vpop.f32.mrb[0].mxu0
        %v538 = vadd.f32 %v413, %v537
        %v539 = vpop.f32.mrb[0].mxu0
        %v540 = vpop.f32.mrb[0].mxu0
        %v541 = vadd.f32 %v413, %v540
        %v542 = vpop.f32.mrb[0].mxu0
        %543 = vmatprep.mubr.bf16.mxu0 0
        %544 = vmatmul.mubr.bf16.gmra.mrb[0].mxu0 %v399
        %v545 = vpop.f32.mrb[0].mxu0
        %v546 = vadd.f32 %v413, %v545
        %v547 = vpop.f32.mrb[0].mxu0
        %v548 = vpop.f32.mrb[0].mxu0
        %v549 = vadd.f32 %v413, %v548
        %v550 = vpop.f32.mrb[0].mxu0
        %551 = vmatprep.mubr.bf16.mxu0 0
        %552 = vmatmul.mubr.bf16.gmra.mrb[0].mxu0 %v400
        %v553 = vpop.f32.mrb[0].mxu0
        %v554 = vadd.f32 %v413, %v553
        %v555 = vpop.f32.mrb[0].mxu0
        %v556 = vpop.f32.mrb[0].mxu0
        %v557 = vadd.f32 %v413, %v556
        %v558 = vpop.f32.mrb[0].mxu0
        %559 = vmatprep.mubr.bf16.mxu0 0
        %560 = vmatmul.mubr.bf16.gmra.mrb[0].mxu0 %v401
        %v561 = vpop.f32.mrb[0].mxu0
        %v562 = vadd.f32 %v413, %v561
        %v563 = vpop.f32.mrb[0].mxu0
        %v564 = vpop.f32.mrb[0].mxu0
        %v565 = vadd.f32 %v413, %v564
        %v566 = vpop.f32.mrb[0].mxu0
        %567 = vmatprep.mubr.bf16.mxu0 0
        %568 = vmatmul.mubr.bf16.gmra.mrb[0].mxu0 %v402
        %v569 = vpop.f32.mrb[0].mxu0
        %v570 = vadd.f32 %v413, %v569
        %v571 = vpop.f32.mrb[0].mxu0
        %v572 = vpop.f32.mrb[0].mxu0
        %v573 = vadd.f32 %v413, %v572
        %v574 = vpop.f32.mrb[0].mxu0
        %575 = vmatprep.mubr.bf16.mxu0 0
        %576 = vmatmul.mubr.bf16.gmra.mrb[0].mxu0 %v403
        %v577 = vpop.f32.mrb[0].mxu0
        %v578 = vadd.f32 %v413, %v577
        %v579 = vpop.f32.mrb[0].mxu0
        %v580 = vpop.f32.mrb[0].mxu0
        %v581 = vadd.f32 %v413, %v580
        %v582 = vpop.f32.mrb[0].mxu0
        %583 = vmatprep.mubr.bf16.mxu0 0
        %584 = vmatmul.mubr.bf16.gmra.mrb[0].mxu0 %v404
        %v585 = vpop.f32.mrb[0].mxu0
        %v586 = vadd.f32 %v413, %v585
        %v587 = vpop.f32.mrb[0].mxu0
        %v588 = vpop.f32.mrb[0].mxu0
        %v589 = vadd.f32 %v413, %v588
        %v590 = vpop.f32.mrb[0].mxu0
        %591 = vmatprep.mubr.bf16.mxu0 0
        %592 = vmatmul.mubr.bf16.gmra.mrb[0].mxu0 %v405
        %v593 = vpop.f32.mrb[0].mxu0
        %v594 = vadd.f32 %v413, %v593
        %v595 = vpop.f32.mrb[0].mxu0
        %v596 = vpop.f32.mrb[0].mxu0
        %v597 = vadd.f32 %v413, %v596
        %v598 = vpop.f32.mrb[0].mxu0
        %599 = vmatprep.mubr.bf16.mxu0 0
        %600 = vmatmul.mubr.bf16.gmra.mrb[0].mxu0 %v406
        %v601 = vpop.f32.mrb[0].mxu0
        %v602 = vadd.f32 %v413, %v601
        %v603 = vpop.f32.mrb[0].mxu0
        %v604 = vpop.f32.mrb[0].mxu0
        %v605 = vadd.f32 %v413, %v604
        %v606 = vpop.f32.mrb[0].mxu0
        %607 = vmatprep.mubr.bf16.mxu0 0
        %608 = vmatmul.mubr.bf16.gmra.mrb[0].mxu0 %v407
        %v609 = vpop.f32.mrb[0].mxu0
        %v610 = vadd.f32 %v413, %v609
        %v611 = vpop.f32.mrb[0].mxu0
        %v612 = vpop.f32.mrb[0].mxu0
        %v613 = vadd.f32 %v413, %v612
        %v614 = vpop.f32.mrb[0].mxu0
        %615 = vmatprep.mubr.bf16.mxu0 0
        %616 = vmatmul.mubr.bf16.gmra.mrb[0].mxu0 %v408
        %v617 = vpop.f32.mrb[0].mxu0
        %v618 = vadd.f32 %v413, %v617
        %v619 = vpop.f32.mrb[0].mxu0
        %v620 = vpop.f32.mrb[0].mxu0
        %v621 = vadd.f32 %v413, %v620
        %v622 = vpop.f32.mrb[0].mxu0
        %623 = vdwg.mxu0
        %v624 = vmax.f32 %v498, 0.0
        %v625 = vmax.f32 %v501, 0.0
        %v626 = vmax.f32 %v506, 0.0
        %v627 = vmax.f32 %v509, 0.0
        %v628 = vmax.f32 %v514, 0.0
        %v629 = vmax.f32 %v517, 0.0
        %v630 = vmax.f32 %v522, 0.0
        %v631 = vmax.f32 %v525, 0.0
        %v632 = vmax.f32 %v530, 0.0
        %v633 = vmax.f32 %v533, 0.0
        %v634 = vmax.f32 %v538, 0.0
        %v635 = vmax.f32 %v541, 0.0
        %v636 = vmax.f32 %v546, 0.0
        %v637 = vmax.f32 %v549, 0.0
        %v638 = vmax.f32 %v554, 0.0
        %v639 = vmax.f32 %v557, 0.0
        %v640 = vmax.f32 %v562, 0.0
        %v641 = vmax.f32 %v565, 0.0
        %v642 = vmax.f32 %v570, 0.0
        %v643 = vmax.f32 %v573, 0.0
        %v644 = vmax.f32 %v578, 0.0
        %v645 = vmax.f32 %v581, 0.0
        %v646 = vmax.f32 %v586, 0.0
        %v647 = vmax.f32 %v589, 0.0
        %v648 = vmax.f32 %v594, 0.0
        %v649 = vmax.f32 %v597, 0.0
        %v650 = vmax.f32 %v602, 0.0
        %v651 = vmax.f32 %v605, 0.0
        %v652 = vmax.f32 %v610, 0.0
        %v653 = vmax.f32 %v613, 0.0
        %v654 = vmax.f32 %v618, 0.0
        %v655 = vmax.f32 %v621, 0.0
        %v656 = vld [vmem:[#allocation7] sm:$0xf]
        %v657 = vld [vmem:[#allocation7 + $0x4] sm:$0xf]
        %v658 = vld [vmem:[#allocation7 + $0x8] sm:$0xf]
        %v659 = vld [vmem:[#allocation7 + $0xc] sm:$0xf]
        %v660 = vld [vmem:[#allocation7 + $0x10] sm:$0xf]
        %v661 = vld [vmem:[#allocation7 + $0x14] sm:$0xf]
        %v662 = vld [vmem:[#allocation7 + $0x18] sm:$0xf]
        %v663 = vld [vmem:[#allocation7 + $0x1c] sm:$0xf]
        %v664 = vld [vmem:[#allocation7 + $0x20] sm:$0xf]
        %v665 = vld [vmem:[#allocation7 + $0x24] sm:$0xf]
        %v666 = vld [vmem:[#allocation7 + $0x28] sm:$0xf]
        %v667 = vld [vmem:[#allocation7 + $0x2c] sm:$0xf]
        %v668 = vld [vmem:[#allocation7 + $0x30] sm:$0xf]
        %v669 = vld [vmem:[#allocation7 + $0x34] sm:$0xf]
        %v670 = vld [vmem:[#allocation7 + $0x38] sm:$0xf]
        %v671 = vld [vmem:[#allocation7 + $0x3c] sm:$0xf]
        %v672 = vld [vmem:[%s4] sm:$0x1]
        %v673 = vpack.c.bf16 %v625, %v624
        %v674 = vpack.c.bf16 %v627, %v626
        %v675 = vpack.c.bf16 %v629, %v628
        %v676 = vpack.c.bf16 %v631, %v630
        %v677 = vpack.c.bf16 %v633, %v632
        %v678 = vpack.c.bf16 %v635, %v634
        %v679 = vpack.c.bf16 %v637, %v636
        %v680 = vpack.c.bf16 %v639, %v638
        %v681 = vpack.c.bf16 %v641, %v640
        %v682 = vpack.c.bf16 %v643, %v642
        %v683 = vpack.c.bf16 %v645, %v644
        %v684 = vpack.c.bf16 %v647, %v646
        %v685 = vpack.c.bf16 %v649, %v648
        %v686 = vpack.c.bf16 %v651, %v650
        %v687 = vpack.c.bf16 %v653, %v652
        %v688 = vpack.c.bf16 %v655, %v654
        %v690 = vlaneseq
        %v691 = vshrl.u32 %v690, 7
        %v692 = vsub.s32 0, %v691
        %v693 = vrot.slane %v672, %v692
        %v711 = vunpack.c.l.b16 %v656
        %v712 = vunpack.c.l.b16 %v657
        %v713 = vunpack.c.l.b16 %v658
        %v714 = vunpack.c.l.b16 %v659
        %v715 = vunpack.c.l.b16 %v660
        %v716 = vunpack.c.l.b16 %v661
        %v717 = vunpack.c.l.b16 %v662
        %v718 = vunpack.c.l.b16 %v663
        %v719 = vunpack.c.l.b16 %v664
        %v720 = vunpack.c.l.b16 %v665
        %v721 = vunpack.c.l.b16 %v666
        %v722 = vunpack.c.l.b16 %v667
        %v723 = vunpack.c.l.b16 %v668
        %v724 = vunpack.c.l.b16 %v669
        %v725 = vunpack.c.l.b16 %v670
        %v726 = vunpack.c.l.b16 %v671
        %v727 = vpack.c.b16 %v712, %v711
        %v728 = vpack.c.b16 %v714, %v713
        %v729 = vpack.c.b16 %v716, %v715
        %v730 = vpack.c.b16 %v718, %v717
        %v731 = vpack.c.b16 %v720, %v719
        %v732 = vpack.c.b16 %v722, %v721
        %v733 = vpack.c.b16 %v724, %v723
        %v734 = vpack.c.b16 %v726, %v725
        %743 = vmatprep.subr.bf16.mxu0 0
        %744 = vmatpush1.bf16.msra.mxu0 %v727
        %745 = vmatprep.subr.bf16.mxu0 0
        %746 = vmatpush1.bf16.msra.mxu0 %v728
        %747 = vmatprep.subr.bf16.mxu0 0
        %748 = vmatpush1.bf16.msra.mxu0 %v729
        %749 = vmatprep.subr.bf16.mxu0 0
        %750 = vmatpush1.bf16.msra.mxu0 %v730
        %751 = vmatprep.subr.bf16.mxu0 0
        %752 = vmatpush1.bf16.msra.mxu0 %v731
        %753 = vmatprep.subr.bf16.mxu0 0
        %754 = vmatpush1.bf16.msra.mxu0 %v732
        %755 = vmatprep.subr.bf16.mxu0 0
        %756 = vmatpush1.bf16.msra.mxu0 %v733
        %757 = vmatprep.subr.bf16.mxu0 0
        %758 = vmatpush1.bf16.msra.mxu0 %v734
        %759 = vmatprep.subr.bf16.mxu0 0
        %760 = vmatpush1.bf16.msra.mxu0 0
        %761 = vmatprep.subr.bf16.mxu0 0
        %762 = vmatpush1.bf16.msra.mxu0 0
        %763 = vmatprep.subr.bf16.mxu0 0
        %764 = vmatpush1.bf16.msra.mxu0 0
        %765 = vmatprep.subr.bf16.mxu0 0
        %766 = vmatpush1.bf16.msra.mxu0 0
        %767 = vmatprep.subr.bf16.mxu0 0
        %768 = vmatpush1.bf16.msra.mxu0 0
        %769 = vmatprep.subr.bf16.mxu0 0
        %770 = vmatpush1.bf16.msra.mxu0 0
        %771 = vmatprep.subr.bf16.mxu0 0
        %772 = vmatpush1.bf16.msra.mxu0 0
        %773 = vmatprep.subr.bf16.mxu0 0
        %774 = vmatpush1.bf16.msra.mxu0 0
        %775 = vmatprep.mubr.bf16.mxu0 0
        %776 = vmatmul.mubr.bf16.gmra.mrb[0].mxu0 %v673
        %v777 = vpop.f32.mrb[0].mxu0
        %v778 = vadd.f32 %v693, %v777
        %v779 = vpop.f32.mrb[0].mxu0
        %v780 = vpop.f32.mrb[0].mxu0
        %v781 = vadd.f32 %v693, %v780
        %v782 = vpop.f32.mrb[0].mxu0
        %783 = vmatprep.mubr.bf16.mxu0 0
        %784 = vmatmul.mubr.bf16.gmra.mrb[0].mxu0 %v674
        %v785 = vpop.f32.mrb[0].mxu0
        %v786 = vadd.f32 %v693, %v785
        %v787 = vpop.f32.mrb[0].mxu0
        %v788 = vpop.f32.mrb[0].mxu0
        %v789 = vadd.f32 %v693, %v788
        %v790 = vpop.f32.mrb[0].mxu0
        %791 = vmatprep.mubr.bf16.mxu0 0
        %792 = vmatmul.mubr.bf16.gmra.mrb[0].mxu0 %v675
        %v793 = vpop.f32.mrb[0].mxu0
        %v794 = vadd.f32 %v693, %v793
        %v795 = vpop.f32.mrb[0].mxu0
        %v796 = vpop.f32.mrb[0].mxu0
        %v797 = vadd.f32 %v693, %v796
        %v798 = vpop.f32.mrb[0].mxu0
        %799 = vmatprep.mubr.bf16.mxu0 0
        %800 = vmatmul.mubr.bf16.gmra.mrb[0].mxu0 %v676
        %v801 = vpop.f32.mrb[0].mxu0
        %v802 = vadd.f32 %v693, %v801
        %v803 = vpop.f32.mrb[0].mxu0
        %v804 = vpop.f32.mrb[0].mxu0
        %v805 = vadd.f32 %v693, %v804
        %v806 = vpop.f32.mrb[0].mxu0
        %807 = vmatprep.mubr.bf16.mxu0 0
        %808 = vmatmul.mubr.bf16.gmra.mrb[0].mxu0 %v677
        %v809 = vpop.f32.mrb[0].mxu0
        %v810 = vadd.f32 %v693, %v809
        %v811 = vpop.f32.mrb[0].mxu0
        %v812 = vpop.f32.mrb[0].mxu0
        %v813 = vadd.f32 %v693, %v812
        %v814 = vpop.f32.mrb[0].mxu0
        %815 = vmatprep.mubr.bf16.mxu0 0
        %816 = vmatmul.mubr.bf16.gmra.mrb[0].mxu0 %v678
        %v817 = vpop.f32.mrb[0].mxu0
        %v818 = vadd.f32 %v693, %v817
        %v819 = vpop.f32.mrb[0].mxu0
        %v820 = vpop.f32.mrb[0].mxu0
        %v821 = vadd.f32 %v693, %v820
        %v822 = vpop.f32.mrb[0].mxu0
        %823 = vmatprep.mubr.bf16.mxu0 0
        %824 = vmatmul.mubr.bf16.gmra.mrb[0].mxu0 %v679
        %v825 = vpop.f32.mrb[0].mxu0
        %v826 = vadd.f32 %v693, %v825
        %v827 = vpop.f32.mrb[0].mxu0
        %v828 = vpop.f32.mrb[0].mxu0
        %v829 = vadd.f32 %v693, %v828
        %v830 = vpop.f32.mrb[0].mxu0
        %831 = vmatprep.mubr.bf16.mxu0 0
        %832 = vmatmul.mubr.bf16.gmra.mrb[0].mxu0 %v680
        %v833 = vpop.f32.mrb[0].mxu0
        %v834 = vadd.f32 %v693, %v833
        %v835 = vpop.f32.mrb[0].mxu0
        %v836 = vpop.f32.mrb[0].mxu0
        %v837 = vadd.f32 %v693, %v836
        %v838 = vpop.f32.mrb[0].mxu0
        %839 = vmatprep.mubr.bf16.mxu0 0
        %840 = vmatmul.mubr.bf16.gmra.mrb[0].mxu0 %v681
        %v841 = vpop.f32.mrb[0].mxu0
        %v842 = vadd.f32 %v693, %v841
        %v843 = vpop.f32.mrb[0].mxu0
        %v844 = vpop.f32.mrb[0].mxu0
        %v845 = vadd.f32 %v693, %v844
        %v846 = vpop.f32.mrb[0].mxu0
        %847 = vmatprep.mubr.bf16.mxu0 0
        %848 = vmatmul.mubr.bf16.gmra.mrb[0].mxu0 %v682
        %v849 = vpop.f32.mrb[0].mxu0
        %v850 = vadd.f32 %v693, %v849
        %v851 = vpop.f32.mrb[0].mxu0
        %v852 = vpop.f32.mrb[0].mxu0
        %v853 = vadd.f32 %v693, %v852
        %v854 = vpop.f32.mrb[0].mxu0
        %855 = vmatprep.mubr.bf16.mxu0 0
        %856 = vmatmul.mubr.bf16.gmra.mrb[0].mxu0 %v683
        %v857 = vpop.f32.mrb[0].mxu0
        %v858 = vadd.f32 %v693, %v857
        %v859 = vpop.f32.mrb[0].mxu0
        %v860 = vpop.f32.mrb[0].mxu0
        %v861 = vadd.f32 %v693, %v860
        %v862 = vpop.f32.mrb[0].mxu0
        %863 = vmatprep.mubr.bf16.mxu0 0
        %864 = vmatmul.mubr.bf16.gmra.mrb[0].mxu0 %v684
        %v865 = vpop.f32.mrb[0].mxu0
        %v866 = vadd.f32 %v693, %v865
        %v867 = vpop.f32.mrb[0].mxu0
        %v868 = vpop.f32.mrb[0].mxu0
        %v869 = vadd.f32 %v693, %v868
        %v870 = vpop.f32.mrb[0].mxu0
        %871 = vmatprep.mubr.bf16.mxu0 0
        %872 = vmatmul.mubr.bf16.gmra.mrb[0].mxu0 %v685
        %v873 = vpop.f32.mrb[0].mxu0
        %v874 = vadd.f32 %v693, %v873
        %v875 = vpop.f32.mrb[0].mxu0
        %v876 = vpop.f32.mrb[0].mxu0
        %v877 = vadd.f32 %v693, %v876
        %v878 = vpop.f32.mrb[0].mxu0
        %879 = vmatprep.mubr.bf16.mxu0 0
        %880 = vmatmul.mubr.bf16.gmra.mrb[0].mxu0 %v686
        %v881 = vpop.f32.mrb[0].mxu0
        %v882 = vadd.f32 %v693, %v881
        %v883 = vpop.f32.mrb[0].mxu0
        %v884 = vpop.f32.mrb[0].mxu0
        %v885 = vadd.f32 %v693, %v884
        %v886 = vpop.f32.mrb[0].mxu0
        %887 = vmatprep.mubr.bf16.mxu0 0
        %888 = vmatmul.mubr.bf16.gmra.mrb[0].mxu0 %v687
        %v889 = vpop.f32.mrb[0].mxu0
        %v890 = vadd.f32 %v693, %v889
        %v891 = vpop.f32.mrb[0].mxu0
        %v892 = vpop.f32.mrb[0].mxu0
        %v893 = vadd.f32 %v693, %v892
        %v894 = vpop.f32.mrb[0].mxu0
        %895 = vmatprep.mubr.bf16.mxu0 0
        %896 = vmatmul.mubr.bf16.gmra.mrb[0].mxu0 %v688
        %v897 = vpop.f32.mrb[0].mxu0
        %v898 = vadd.f32 %v693, %v897
        %v899 = vpop.f32.mrb[0].mxu0
        %v900 = vpop.f32.mrb[0].mxu0
        %v901 = vadd.f32 %v693, %v900
        %v902 = vpop.f32.mrb[0].mxu0
        %903 = vdwg.mxu0
        %v904 = vmax.f32 %v778, 0.0
        %v905 = vmax.f32 %v781, 0.0
        %v906 = vmax.f32 %v786, 0.0
        %v907 = vmax.f32 %v789, 0.0
        %v908 = vmax.f32 %v794, 0.0
        %v909 = vmax.f32 %v797, 0.0
        %v910 = vmax.f32 %v802, 0.0
        %v911 = vmax.f32 %v805, 0.0
        %v912 = vmax.f32 %v810, 0.0
        %v913 = vmax.f32 %v813, 0.0
        %v914 = vmax.f32 %v818, 0.0
        %v915 = vmax.f32 %v821, 0.0
        %v916 = vmax.f32 %v826, 0.0
        %v917 = vmax.f32 %v829, 0.0
        %v918 = vmax.f32 %v834, 0.0
        %v919 = vmax.f32 %v837, 0.0
        %v920 = vmax.f32 %v842, 0.0
        %v921 = vmax.f32 %v845, 0.0
        %v922 = vmax.f32 %v850, 0.0
        %v923 = vmax.f32 %v853, 0.0
        %v924 = vmax.f32 %v858, 0.0
        %v925 = vmax.f32 %v861, 0.0
        %v926 = vmax.f32 %v866, 0.0
        %v927 = vmax.f32 %v869, 0.0
        %v928 = vmax.f32 %v874, 0.0
        %v929 = vmax.f32 %v877, 0.0
        %v930 = vmax.f32 %v882, 0.0
        %v931 = vmax.f32 %v885, 0.0
        %v932 = vmax.f32 %v890, 0.0
        %v933 = vmax.f32 %v893, 0.0
        %v934 = vmax.f32 %v898, 0.0
        %v935 = vmax.f32 %v901, 0.0
        %v936 = vld [vmem:[#allocation8] sm:$0xf]
        %v937 = vld [vmem:[#allocation8 + $0x4] sm:$0xf]
        %v938 = vld [vmem:[#allocation8 + $0x8] sm:$0xf]
        %v939 = vld [vmem:[#allocation8 + $0xc] sm:$0xf]
        %v940 = vld [vmem:[#allocation8 + $0x10] sm:$0xf]
        %v941 = vld [vmem:[#allocation8 + $0x14] sm:$0xf]
        %v942 = vld [vmem:[#allocation8 + $0x18] sm:$0xf]
        %v943 = vld [vmem:[#allocation8 + $0x1c] sm:$0xf]
        %v944 = vld [vmem:[#allocation8 + $0x20] sm:$0xf]
        %v945 = vld [vmem:[#allocation8 + $0x24] sm:$0xf]
        %v946 = vld [vmem:[#allocation8 + $0x28] sm:$0xf]
        %v947 = vld [vmem:[#allocation8 + $0x2c] sm:$0xf]
        %v948 = vld [vmem:[#allocation8 + $0x30] sm:$0xf]
        %v949 = vld [vmem:[#allocation8 + $0x34] sm:$0xf]
        %v950 = vld [vmem:[#allocation8 + $0x38] sm:$0xf]
        %v951 = vld [vmem:[#allocation8 + $0x3c] sm:$0xf]
        %v952 = vld [vmem:[%s6] sm:$0x1]
        %v953 = vpack.c.bf16 %v905, %v904
        %v954 = vpack.c.bf16 %v907, %v906
        %v955 = vpack.c.bf16 %v909, %v908
        %v956 = vpack.c.bf16 %v911, %v910
        %v957 = vpack.c.bf16 %v913, %v912
        %v958 = vpack.c.bf16 %v915, %v914
        %v959 = vpack.c.bf16 %v917, %v916
        %v960 = vpack.c.bf16 %v919, %v918
        %v961 = vpack.c.bf16 %v921, %v920
        %v962 = vpack.c.bf16 %v923, %v922
        %v963 = vpack.c.bf16 %v925, %v924
        %v964 = vpack.c.bf16 %v927, %v926
        %v965 = vpack.c.bf16 %v929, %v928
        %v966 = vpack.c.bf16 %v931, %v930
        %v967 = vpack.c.bf16 %v933, %v932
        %v968 = vpack.c.bf16 %v935, %v934
        %v970 = vlaneseq
        %v971 = vshrl.u32 %v970, 7
        %v972 = vsub.s32 0, %v971
        %v973 = vrot.slane %v952, %v972
        %v991 = vunpack.c.l.b16 %v936
        %v992 = vunpack.c.l.b16 %v937
        %v993 = vunpack.c.l.b16 %v938
        %v994 = vunpack.c.l.b16 %v939
        %v995 = vunpack.c.l.b16 %v940
        %v996 = vunpack.c.l.b16 %v941
        %v997 = vunpack.c.l.b16 %v942
        %v998 = vunpack.c.l.b16 %v943
        %v999 = vunpack.c.l.b16 %v944
        %v1000 = vunpack.c.l.b16 %v945
        %v1001 = vunpack.c.l.b16 %v946
        %v1002 = vunpack.c.l.b16 %v947
        %v1003 = vunpack.c.l.b16 %v948
        %v1004 = vunpack.c.l.b16 %v949
        %v1005 = vunpack.c.l.b16 %v950
        %v1006 = vunpack.c.l.b16 %v951
        %v1007 = vpack.c.b16 %v992, %v991
        %v1008 = vpack.c.b16 %v994, %v993
        %v1009 = vpack.c.b16 %v996, %v995
        %v1010 = vpack.c.b16 %v998, %v997
        %v1011 = vpack.c.b16 %v1000, %v999
        %v1012 = vpack.c.b16 %v1002, %v1001
        %v1013 = vpack.c.b16 %v1004, %v1003
        %v1014 = vpack.c.b16 %v1006, %v1005
        %1023 = vmatprep.subr.bf16.mxu0 0
        %1024 = vmatpush1.bf16.msra.mxu0 %v1007
        %1025 = vmatprep.subr.bf16.mxu0 0
        %1026 = vmatpush1.bf16.msra.mxu0 %v1008
        %1027 = vmatprep.subr.bf16.mxu0 0
        %1028 = vmatpush1.bf16.msra.mxu0 %v1009
        %1029 = vmatprep.subr.bf16.mxu0 0
        %1030 = vmatpush1.bf16.msra.mxu0 %v1010
        %1031 = vmatprep.subr.bf16.mxu0 0
        %1032 = vmatpush1.bf16.msra.mxu0 %v1011
        %1033 = vmatprep.subr.bf16.mxu0 0
        %1034 = vmatpush1.bf16.msra.mxu0 %v1012
        %1035 = vmatprep.subr.bf16.mxu0 0
        %1036 = vmatpush1.bf16.msra.mxu0 %v1013
        %1037 = vmatprep.subr.bf16.mxu0 0
        %1038 = vmatpush1.bf16.msra.mxu0 %v1014
        %1039 = vmatprep.subr.bf16.mxu0 0
        %1040 = vmatpush1.bf16.msra.mxu0 0
        %1041 = vmatprep.subr.bf16.mxu0 0
        %1042 = vmatpush1.bf16.msra.mxu0 0
        %1043 = vmatprep.subr.bf16.mxu0 0
        %1044 = vmatpush1.bf16.msra.mxu0 0
        %1045 = vmatprep.subr.bf16.mxu0 0
        %1046 = vmatpush1.bf16.msra.mxu0 0
        %1047 = vmatprep.subr.bf16.mxu0 0
        %1048 = vmatpush1.bf16.msra.mxu0 0
        %1049 = vmatprep.subr.bf16.mxu0 0
        %1050 = vmatpush1.bf16.msra.mxu0 0
        %1051 = vmatprep.subr.bf16.mxu0 0
        %1052 = vmatpush1.bf16.msra.mxu0 0
        %1053 = vmatprep.subr.bf16.mxu0 0
        %1054 = vmatpush1.bf16.msra.mxu0 0
        %1055 = vmatprep.mubr.bf16.mxu0 0
        %1056 = vmatmul.mubr.bf16.gmra.mrb[0].mxu0 %v953
        %v1057 = vpop.f32.mrb[0].mxu0
        %v1058 = vadd.f32 %v973, %v1057
        %v1059 = vpop.f32.mrb[0].mxu0
        %v1060 = vpop.f32.mrb[0].mxu0
        %v1061 = vadd.f32 %v973, %v1060
        %v1062 = vpop.f32.mrb[0].mxu0
        %1063 = vmatprep.mubr.bf16.mxu0 0
        %1064 = vmatmul.mubr.bf16.gmra.mrb[0].mxu0 %v954
        %v1065 = vpop.f32.mrb[0].mxu0
        %v1066 = vadd.f32 %v973, %v1065
        %v1067 = vpop.f32.mrb[0].mxu0
        %v1068 = vpop.f32.mrb[0].mxu0
        %v1069 = vadd.f32 %v973, %v1068
        %v1070 = vpop.f32.mrb[0].mxu0
        %1071 = vmatprep.mubr.bf16.mxu0 0
        %1072 = vmatmul.mubr.bf16.gmra.mrb[0].mxu0 %v955
        %v1073 = vpop.f32.mrb[0].mxu0
        %v1074 = vadd.f32 %v973, %v1073
        %v1075 = vpop.f32.mrb[0].mxu0
        %v1076 = vpop.f32.mrb[0].mxu0
        %v1077 = vadd.f32 %v973, %v1076
        %v1078 = vpop.f32.mrb[0].mxu0
        %1079 = vmatprep.mubr.bf16.mxu0 0
        %1080 = vmatmul.mubr.bf16.gmra.mrb[0].mxu0 %v956
        %v1081 = vpop.f32.mrb[0].mxu0
        %v1082 = vadd.f32 %v973, %v1081
        %v1083 = vpop.f32.mrb[0].mxu0
        %v1084 = vpop.f32.mrb[0].mxu0
        %v1085 = vadd.f32 %v973, %v1084
        %v1086 = vpop.f32.mrb[0].mxu0
        %1087 = vmatprep.mubr.bf16.mxu0 0
        %1088 = vmatmul.mubr.bf16.gmra.mrb[0].mxu0 %v957
        %v1089 = vpop.f32.mrb[0].mxu0
        %v1090 = vadd.f32 %v973, %v1089
        %v1091 = vpop.f32.mrb[0].mxu0
        %v1092 = vpop.f32.mrb[0].mxu0
        %v1093 = vadd.f32 %v973, %v1092
        %v1094 = vpop.f32.mrb[0].mxu0
        %1095 = vmatprep.mubr.bf16.mxu0 0
        %1096 = vmatmul.mubr.bf16.gmra.mrb[0].mxu0 %v958
        %v1097 = vpop.f32.mrb[0].mxu0
        %v1098 = vadd.f32 %v973, %v1097
        %v1099 = vpop.f32.mrb[0].mxu0
        %v1100 = vpop.f32.mrb[0].mxu0
        %v1101 = vadd.f32 %v973, %v1100
        %v1102 = vpop.f32.mrb[0].mxu0
        %1103 = vmatprep.mubr.bf16.mxu0 0
        %1104 = vmatmul.mubr.bf16.gmra.mrb[0].mxu0 %v959
        %v1105 = vpop.f32.mrb[0].mxu0
        %v1106 = vadd.f32 %v973, %v1105
        %v1107 = vpop.f32.mrb[0].mxu0
        %v1108 = vpop.f32.mrb[0].mxu0
        %v1109 = vadd.f32 %v973, %v1108
        %v1110 = vpop.f32.mrb[0].mxu0
        %1111 = vmatprep.mubr.bf16.mxu0 0
        %1112 = vmatmul.mubr.bf16.gmra.mrb[0].mxu0 %v960
        %v1113 = vpop.f32.mrb[0].mxu0
        %v1114 = vadd.f32 %v973, %v1113
        %v1115 = vpop.f32.mrb[0].mxu0
        %v1116 = vpop.f32.mrb[0].mxu0
        %v1117 = vadd.f32 %v973, %v1116
        %v1118 = vpop.f32.mrb[0].mxu0
        %1119 = vmatprep.mubr.bf16.mxu0 0
        %1120 = vmatmul.mubr.bf16.gmra.mrb[0].mxu0 %v961
        %v1121 = vpop.f32.mrb[0].mxu0
        %v1122 = vadd.f32 %v973, %v1121
        %v1123 = vpop.f32.mrb[0].mxu0
        %v1124 = vpop.f32.mrb[0].mxu0
        %v1125 = vadd.f32 %v973, %v1124
        %v1126 = vpop.f32.mrb[0].mxu0
        %1127 = vmatprep.mubr.bf16.mxu0 0
        %1128 = vmatmul.mubr.bf16.gmra.mrb[0].mxu0 %v962
        %v1129 = vpop.f32.mrb[0].mxu0
        %v1130 = vadd.f32 %v973, %v1129
        %v1131 = vpop.f32.mrb[0].mxu0
        %v1132 = vpop.f32.mrb[0].mxu0
        %v1133 = vadd.f32 %v973, %v1132
        %v1134 = vpop.f32.mrb[0].mxu0
        %1135 = vmatprep.mubr.bf16.mxu0 0
        %1136 = vmatmul.mubr.bf16.gmra.mrb[0].mxu0 %v963
        %v1137 = vpop.f32.mrb[0].mxu0
        %v1138 = vadd.f32 %v973, %v1137
        %v1139 = vpop.f32.mrb[0].mxu0
        %v1140 = vpop.f32.mrb[0].mxu0
        %v1141 = vadd.f32 %v973, %v1140
        %v1142 = vpop.f32.mrb[0].mxu0
        %1143 = vmatprep.mubr.bf16.mxu0 0
        %1144 = vmatmul.mubr.bf16.gmra.mrb[0].mxu0 %v964
        %v1145 = vpop.f32.mrb[0].mxu0
        %v1146 = vadd.f32 %v973, %v1145
        %v1147 = vpop.f32.mrb[0].mxu0
        %v1148 = vpop.f32.mrb[0].mxu0
        %v1149 = vadd.f32 %v973, %v1148
        %v1150 = vpop.f32.mrb[0].mxu0
        %1151 = vmatprep.mubr.bf16.mxu0 0
        %1152 = vmatmul.mubr.bf16.gmra.mrb[0].mxu0 %v965
        %v1153 = vpop.f32.mrb[0].mxu0
        %v1154 = vadd.f32 %v973, %v1153
        %v1155 = vpop.f32.mrb[0].mxu0
        %v1156 = vpop.f32.mrb[0].mxu0
        %v1157 = vadd.f32 %v973, %v1156
        %v1158 = vpop.f32.mrb[0].mxu0
        %1159 = vmatprep.mubr.bf16.mxu0 0
        %1160 = vmatmul.mubr.bf16.gmra.mrb[0].mxu0 %v966
        %v1161 = vpop.f32.mrb[0].mxu0
        %v1162 = vadd.f32 %v973, %v1161
        %v1163 = vpop.f32.mrb[0].mxu0
        %v1164 = vpop.f32.mrb[0].mxu0
        %v1165 = vadd.f32 %v973, %v1164
        %v1166 = vpop.f32.mrb[0].mxu0
        %1167 = vmatprep.mubr.bf16.mxu0 0
        %1168 = vmatmul.mubr.bf16.gmra.mrb[0].mxu0 %v967
        %v1169 = vpop.f32.mrb[0].mxu0
        %v1170 = vadd.f32 %v973, %v1169
        %v1171 = vpop.f32.mrb[0].mxu0
        %v1172 = vpop.f32.mrb[0].mxu0
        %v1173 = vadd.f32 %v973, %v1172
        %v1174 = vpop.f32.mrb[0].mxu0
        %1175 = vmatprep.mubr.bf16.mxu0 0
        %1176 = vmatmul.mubr.bf16.gmra.mrb[0].mxu0 %v968
        %v1177 = vpop.f32.mrb[0].mxu0
        %v1178 = vadd.f32 %v973, %v1177
        %v1179 = vpop.f32.mrb[0].mxu0
        %v1180 = vpop.f32.mrb[0].mxu0
        %v1181 = vadd.f32 %v973, %v1180
        %v1182 = vpop.f32.mrb[0].mxu0
        %1183 = vdwg.mxu0
        %1184 = vst [vmem:[%s340] sm:$0xff] %v1058
        %1185 = vst [vmem:[%s340 + $0x8] sm:$0xff] %v1061
        %1186 = vst [vmem:[%s340 + $0x10] sm:$0xff] %v1066
        %1187 = vst [vmem:[%s340 + $0x18] sm:$0xff] %v1069
        %1188 = vst [vmem:[%s340 + $0x20] sm:$0xff] %v1074
        %1189 = vst [vmem:[%s340 + $0x28] sm:$0xff] %v1077
        %1190 = vst [vmem:[%s340 + $0x30] sm:$0xff] %v1082
        %1191 = vst [vmem:[%s340 + $0x38] sm:$0xff] %v1085
        %1192 = vst [vmem:[%s340 + $0x40] sm:$0xff] %v1090
        %1193 = vst [vmem:[%s340 + $0x48] sm:$0xff] %v1093
        %1194 = vst [vmem:[%s340 + $0x50] sm:$0xff] %v1098
        %1195 = vst [vmem:[%s340 + $0x58] sm:$0xff] %v1101
        %1196 = vst [vmem:[%s340 + $0x60] sm:$0xff] %v1106
        %1197 = vst [vmem:[%s340 + $0x68] sm:$0xff] %v1109
        %1198 = vst [vmem:[%s340 + $0x70] sm:$0xff] %v1114
        %1199 = vst [vmem:[%s340 + $0x78] sm:$0xff] %v1117
        %1200 = vst [vmem:[%s340 + $0x80] sm:$0xff] %v1122
        %1201 = vst [vmem:[%s340 + $0x88] sm:$0xff] %v1125
        %1202 = vst [vmem:[%s340 + $0x90] sm:$0xff] %v1130
        %1203 = vst [vmem:[%s340 + $0x98] sm:$0xff] %v1133
        %1204 = vst [vmem:[%s340 + $0xa0] sm:$0xff] %v1138
        %1205 = vst [vmem:[%s340 + $0xa8] sm:$0xff] %v1141
        %1206 = vst [vmem:[%s340 + $0xb0] sm:$0xff] %v1146
        %1207 = vst [vmem:[%s340 + $0xb8] sm:$0xff] %v1149
        %1208 = vst [vmem:[%s340 + $0xc0] sm:$0xff] %v1154
        %1209 = vst [vmem:[%s340 + $0xc8] sm:$0xff] %v1157
        %1210 = vst [vmem:[%s340 + $0xd0] sm:$0xff] %v1162
        %1211 = vst [vmem:[%s340 + $0xd8] sm:$0xff] %v1165
        %1212 = vst [vmem:[%s340 + $0xe0] sm:$0xff] %v1170
        %1213 = vst [vmem:[%s340 + $0xe8] sm:$0xff] %v1173
        %1214 = vst [vmem:[%s340 + $0xf0] sm:$0xff] %v1178
        %1215 = vst [vmem:[%s340 + $0xf8] sm:$0xff] %v1181
        %s1216 = sand.u32 %s186, 1
        %s1217 = scalar_lea.sflag [#allocation4], %s1216
        %s1218 = sand.u32 %s186, 1
        %s1219 = smul.addr %s1218, 256
        %s1220 = scalar_lea.vmem [#allocation10], %s1219
        // Predicated region
        $region65: #{tpu_custom_call.1} parent=47 // pred_check
          %p1221 = pneg %p196
        $region66: #{tpu_custom_call.1} parent=47 // pred_check_branch
          %1223 = sbr.rel (%p1221) target = $region68
        $region67: #{tpu_custom_call.1} parent=47 // pred_region
          %s1224 = smul.u32 32, %s26
          %s1226 = ssub.s32 4096, 4096
          %1227 = vsyncadd %s1217, %s1226
          %s1228 = smul.addr %s1224, 128
          %s1229 = scalar_lea.hbm %s7, %s1228
          %s1230 = sshll.u32 %s1220, 4
          %s1231 = int_to_ptr.vmem [resolvable:$true] %s1230
          %1236 = dma.vmem_to_hbm [thread:$0]  %s1231, 4096, %s1229, %s1217, 128, 128, 8
        $region68: #{tpu_custom_call.1} parent=47 // pred_fallthru
          _
      $region48: #{tpu_custom_call.1} parent=5 // pred_fallthru
        _
      %p1237 = scmp.le.s32.totalorder 2, %s21
      // Predicated region
      $region69: #{tpu_custom_call.1} parent=5 // pred_check
        %p1238 = pneg %p1237
      $region70: #{tpu_custom_call.1} parent=5 // pred_check_branch
        %1240 = sbr.rel (%p1238) target = $region72
      $region71: #{tpu_custom_call.1} parent=5 // pred_region
        %s1241 = ssub.s32 %s21, 2
        // Predicated region
        $region73: #{tpu_custom_call.1} parent=71 // pred_check
          %p1242 = pneg %p202
        $region74: #{tpu_custom_call.1} parent=71 // pred_check_branch
          %1244 = sbr.rel (%p1242) target = $region76
        $region75: #{tpu_custom_call.1} parent=71 // pred_region
          %s1245 = sand.u32 %s187, 1
          %s1246 = scalar_lea.sflag [#allocation4], %s1245
          %s1247 = sand.u32 %s187, 1
          %s1248 = smul.addr %s1247, 256
          %s1249 = scalar_lea.vmem [#allocation10], %s1248
          %1250 = dma.done %s1246, 4096
        $region76: #{tpu_custom_call.1} parent=71 // pred_fallthru
          _
      $region72: #{tpu_custom_call.1} parent=5 // pred_fallthru
        _
    $region6: #{tpu_custom_call.1} parent=1 // loop_footer
      %s25 = sadd.s32 1, %s21
    $region7: #{tpu_custom_call.1} parent=1 // loop_footer_branch
      %20 = sbr.rel target = $region3
    $region8: #{tpu_custom_call.1} parent=1 // loop_exit
      _
    %1251 = vsyncpa [#allocation3], 1
    %s1252 = scalar_lea.sflag [#allocation3], 1
    %1253 = vsyncpa %s1252, 1
    %1254 = vsyncpa [#allocation6], 1
    %1255 = vsyncpa [#allocation9], 1
    %1256 = vsyncpa [#allocation4], 1
    %s1257 = scalar_lea.sflag [#allocation4], 1
    %1258 = vsyncpa %s1257, 1

// kernel: tpu_custom_call.1
$region0: #{tpu_custom_call.1}
  #allocation0 [shape = 'u32[]', space=smem, size = 0x4, offset = 0x4, fixed_abs, tag = 'smem constant byte address 0x4 - core index']
  #allocation1 [shape = 'u32[144,128]{1,0:T(1,128)}', space=vmem, size = 0x12000, scoped, tag = 'internal scratch']
  %s0 = inlined_call_operand.hbm [shape: f32[512,128], index: 0, kind: input, shape index: {}]
  %s1 = inlined_call_operand.hbm [shape: bf16[128,128], index: 1, kind: input, shape index: {}]
  %s2 = inlined_call_operand.vmem [shape: f32[1,128], index: 2, kind: input, shape index: {}]
  %s3 = inlined_call_operand.hbm [shape: bf16[128,128], index: 3, kind: input, shape index: {}]
  %s4 = inlined_call_operand.vmem [shape: f32[1,128], index: 4, kind: input, shape index: {}]
  %s5 = inlined_call_operand.hbm [shape: bf16[128,128], index: 5, kind: input, shape index: {}]
  %s6 = inlined_call_operand.vmem [shape: f32[1,128], index: 6, kind: input, shape index: {}]
  %s7 = inlined_call_operand.hbm [shape: f32[512,128], index: 7, kind: output, shape index: {}]
  %s8 = sld [smem:[#allocation0]]
  $region77: #{tpu_custom_call.1} parent=0
    _
  %s10 = ssub.s32 1, %s8
  %s11 = scalar_select 0, %s10, %s8
  $region1: #{tpu_custom_call.1} parent=0
    #allocation2 [shape = 'u8[262144]{0}', space=vmem, size = 0x40000, scoped, tag = 'input window, operand 0']
    #allocation3 [shape = 's32[2]{0}', space=sflag, size = 0x8, scoped, tag = 'scoped memory for tpu_custom_call.1']
    #allocation4 [shape = 's32[2]{0}', space=sflag, size = 0x8, scoped, tag = 'scoped memory for tpu_custom_call.1']
    #allocation5 [shape = 'u8[32768]{0}', space=vmem, size = 0x8000, scoped, tag = 'input window, operand 1, single buffered']
    #allocation6 [shape = 's32[1]{0}', space=sflag, size = 0x4, scoped, tag = 'scoped memory for tpu_custom_call.1']
    #allocation7 [shape = 'u8[32768]{0}', space=vmem, size = 0x8000, scoped, tag = 'input window, operand 3, single buffered']
    #allocation8 [shape = 'u8[32768]{0}', space=vmem, size = 0x8000, scoped, tag = 'input window, operand 5, single buffered']
    #allocation9 [shape = 's32[1]{0}', space=sflag, size = 0x4, scoped, tag = 'scoped memory for tpu_custom_call.1']
    #allocation10 [shape = 'u8[262144]{0}', space=vmem, size = 0x40000, scoped, tag = 'output window, operand 0']
    %12 = vsyncpa [#allocation3], 0
    %s13 = scalar_lea.sflag [#allocation3], 1
    %14 = vsyncpa %s13, 0
    %15 = vsyncpa [#allocation6], 0
    %16 = vsyncpa [#allocation9], 0
    %17 = vsyncpa [#allocation4], 0
    %s18 = scalar_lea.sflag [#allocation4], 1
    %19 = vsyncpa %s18, 0
    loop: start=0, step=1, limit=4
    $region2: #{tpu_custom_call.1} parent=1 // loop_pre_header
      _
    $region3: #{tpu_custom_call.1} parent=1 // loop_header
      %s21 = sphi 0, %s25
      %p22 = scmp.ge.s32.totalorder %s21, 4
      %s31 = sphi 0, %s33
      %s34 = sphi 0, %s31
      %s35 = sphi 0, %s34
      %s51 = sphi 0, %s35
      %s55 = sphi 0, %s55
      %s57 = sphi 0, %s55
      %s58 = sphi 0, %s57
      %s72 = sphi 0, %s58
      %s76 = sphi 0, %s76
      %s78 = sphi 0, %s76
      %s79 = sphi 0, %s78
      %s93 = sphi 0, %s79
      %s97 = sphi 0, %s97
      %s99 = sphi 0, %s97
      %s100 = sphi 0, %s99
      %s114 = sphi 0, %s100
      %s118 = sphi 0, %s118
      %s120 = sphi 0, %s118
      %s121 = sphi 0, %s120
      %s135 = sphi 0, %s121
      %s139 = sphi 0, %s139
      %s141 = sphi 0, %s139
      %s142 = sphi 0, %s141
      %s156 = sphi 0, %s142
      %s160 = sphi 0, %s160
      %s162 = sphi 0, %s160
      %s163 = sphi 0, %s162
      %s177 = sphi 0, %s163
      %s183 = sphi 0, %s185
      %s186 = sphi 0, %s183
      %s187 = sphi 0, %s186
      %s203 = sphi 0, %s187
    $region4: #{tpu_custom_call.1} parent=1 // loop_header_branch
      %24 = sbr.rel (%p22) target = $region8
    $region5: #{tpu_custom_call.1} parent=1 // loop_body
      %s26 = ssub.s32 %s21, 1
      %s27 = ssub.s32 %s21, 2
      %s28 = sadd.s32 %s21, 1
      %s29 = ssub.s32 %s21, %s28
      %p30 = scmp.eq.s32.totalorder %s29, 0
      %s32 = sadd.s32 %s31, 1
      %s33 = scalar_select %p30, %s31, %s32
      %p36 = pneg %p30
      %p37 = scmp.eq.s32.totalorder %s21, 1
      %p38 = por %p36, %p37
      %p39 = scmp.ne.s32.totalorder %s31, %s34
      %p40 = scmp.eq.s32.totalorder %s21, 0
      %p41 = por %p39, %p40
      %p42 = scmp.ne.s32.totalorder %s31, %s34
      %p43 = scmp.eq.s32.totalorder %s26, 1
      %p44 = por %p42, %p43
      %p45 = scmp.ne.s32.totalorder %s34, %s35
      %p46 = scmp.eq.s32.totalorder %s26, 0
      %p47 = por %p45, %p46
      %p48 = scmp.ne.s32.totalorder %s34, %s35
      %p49 = scmp.eq.s32.totalorder %s27, 1
      %p50 = por %p48, %p49
      %p52 = scmp.ne.s32.totalorder %s35, %s51
      %p53 = scmp.eq.s32.totalorder %s27, 0
      %p54 = por %p52, %p53
      %s56 = sadd.s32 %s55, 1
      %p59 = scmp.eq.s32.totalorder %s21, 1
      %p60 = scmp.ne.s32.totalorder %s55, %s57
      %p61 = scmp.eq.s32.totalorder %s21, 0
      %p62 = por %p60, %p61
      %p63 = scmp.ne.s32.totalorder %s55, %s57
      %p64 = scmp.eq.s32.totalorder %s26, 1
      %p65 = por %p63, %p64
      %p66 = scmp.ne.s32.totalorder %s57, %s58
      %p67 = scmp.eq.s32.totalorder %s26, 0
      %p68 = por %p66, %p67
      %p69 = scmp.ne.s32.totalorder %s57, %s58
      %p70 = scmp.eq.s32.totalorder %s27, 1
      %p71 = por %p69, %p70
      %p73 = scmp.ne.s32.totalorder %s58, %s72
      %p74 = scmp.eq.s32.totalorder %s27, 0
      %p75 = por %p73, %p74
      %s77 = sadd.s32 %s76, 1
      %p80 = scmp.eq.s32.totalorder %s21, 1
      %p81 = scmp.ne.s32.totalorder %s76, %s78
      %p82 = scmp.eq.s32.totalorder %s21, 0
      %p83 = por %p81, %p82
      %p84 = scmp.ne.s32.totalorder %s76, %s78
      %p85 = scmp.eq.s32.totalorder %s26, 1
      %p86 = por %p84, %p85
      %p87 = scmp.ne.s32.totalorder %s78, %s79
      %p88 = scmp.eq.s32.totalorder %s26, 0
      %p89 = por %p87, %p88
      %p90 = scmp.ne.s32.totalorder %s78, %s79
      %p91 = scmp.eq.s32.totalorder %s27, 1
      %p92 = por %p90, %p91
      %p94 = scmp.ne.s32.totalorder %s79, %s93
      %p95 = scmp.eq.s32.totalorder %s27, 0
      %p96 = por %p94, %p95
      %s98 = sadd.s32 %s97, 1
      %p101 = scmp.eq.s32.totalorder %s21, 1
      %p102 = scmp.ne.s32.totalorder %s97, %s99
      %p103 = scmp.eq.s32.totalorder %s21, 0
      %p104 = por %p102, %p103
      %p105 = scmp.ne.s32.totalorder %s97, %s99
      %p106 = scmp.eq.s32.totalorder %s26, 1
      %p107 = por %p105, %p106
      %p108 = scmp.ne.s32.totalorder %s99, %s100
      %p109 = scmp.eq.s32.totalorder %s26, 0
      %p110 = por %p108, %p109
      %p111 = scmp.ne.s32.totalorder %s99, %s100
      %p112 = scmp.eq.s32.totalorder %s27, 1
      %p113 = por %p111, %p112
      %p115 = scmp.ne.s32.totalorder %s100, %s114
      %p116 = scmp.eq.s32.totalorder %s27, 0
      %p117 = por %p115, %p116
      %s119 = sadd.s32 %s118, 1
      %p122 = scmp.eq.s32.totalorder %s21, 1
      %p123 = scmp.ne.s32.totalorder %s118, %s120
      %p124 = scmp.eq.s32.totalorder %s21, 0
      %p125 = por %p123, %p124
      %p126 = scmp.ne.s32.totalorder %s118, %s120
      %p127 = scmp.eq.s32.totalorder %s26, 1
      %p128 = por %p126, %p127
      %p129 = scmp.ne.s32.totalorder %s120, %s121
      %p130 = scmp.eq.s32.totalorder %s26, 0
      %p131 = por %p129, %p130
      %p132 = scmp.ne.s32.totalorder %s120, %s121
      %p133 = scmp.eq.s32.totalorder %s27, 1
      %p134 = por %p132, %p133
      %p136 = scmp.ne.s32.totalorder %s121, %s135
      %p137 = scmp.eq.s32.totalorder %s27, 0
      %p138 = por %p136, %p137
      %s140 = sadd.s32 %s139, 1
      %p143 = scmp.eq.s32.totalorder %s21, 1
      %p144 = scmp.ne.s32.totalorder %s139, %s141
      %p145 = scmp.eq.s32.totalorder %s21, 0
      %p146 = por %p144, %p145
      %p147 = scmp.ne.s32.totalorder %s139, %s141
      %p148 = scmp.eq.s32.totalorder %s26, 1
      %p149 = por %p147, %p148
      %p150 = scmp.ne.s32.totalorder %s141, %s142
      %p151 = scmp.eq.s32.totalorder %s26, 0
      %p152 = por %p150, %p151
      %p153 = scmp.ne.s32.totalorder %s141, %s142
      %p154 = scmp.eq.s32.totalorder %s27, 1
      %p155 = por %p153, %p154
      %p157 = scmp.ne.s32.totalorder %s142, %s156
      %p158 = scmp.eq.s32.totalorder %s27, 0
      %p159 = por %p157, %p158
      %s161 = sadd.s32 %s160, 1
      %p164 = scmp.eq.s32.totalorder %s21, 1
      %p165 = scmp.ne.s32.totalorder %s160, %s162
      %p166 = scmp.eq.s32.totalorder %s21, 0
      %p167 = por %p165, %p166
      %p168 = scmp.ne.s32.totalorder %s160, %s162
      %p169 = scmp.eq.s32.totalorder %s26, 1
      %p170 = por %p168, %p169
      %p171 = scmp.ne.s32.totalorder %s162, %s163
      %p172 = scmp.eq.s32.totalorder %s26, 0
      %p173 = por %p171, %p172
      %p174 = scmp.ne.s32.totalorder %s162, %s163
      %p175 = scmp.eq.s32.totalorder %s27, 1
      %p176 = por %p174, %p175
      %p178 = scmp.ne.s32.totalorder %s163, %s177
      %p179 = scmp.eq.s32.totalorder %s27, 0
      %p180 = por %p178, %p179
      %s181 = ssub.s32 %s21, %s28
      %p182 = scmp.eq.s32.totalorder %s181, 0
      %s184 = sadd.s32 %s183, 1
      %s185 = scalar_select %p182, %s183, %s184
      %p188 = pneg %p182
      %p189 = scmp.eq.s32.totalorder %s21, 1
      %p190 = por %p188, %p189
      %p191 = scmp.ne.s32.totalorder %s183, %s186
      %p192 = scmp.eq.s32.totalorder %s21, 0
      %p193 = por %p191, %p192
      %p194 = scmp.ne.s32.totalorder %s183, %s186
      %p195 = scmp.eq.s32.totalorder %s26, 1
      %p196 = por %p194, %p195
      %p197 = scmp.ne.s32.totalorder %s186, %s187
      %p198 = scmp.eq.s32.totalorder %s26, 0
      %p199 = por %p197, %p198
      %p200 = scmp.ne.s32.totalorder %s186, %s187
      %p201 = scmp.eq.s32.totalorder %s27, 1
      %p202 = por %p200, %p201
      %p204 = scmp.ne.s32.totalorder %s187, %s203
      %p205 = scmp.eq.s32.totalorder %s27, 0
      %p206 = por %p204, %p205
      %p207 = scmp.le.s32.totalorder 1, %s21
      %p208 = scmp.lt.s32.totalorder %s21, 3
      %p209 = pnand %p207, %p208
      %p210 = pneg %p209
      // Predicated region
      $region9: #{tpu_custom_call.1} parent=5 // pred_check
        _
      $region10: #{tpu_custom_call.1} parent=5 // pred_check_branch
        %212 = sbr.rel (%p209) target = $region12
      $region11: #{tpu_custom_call.1} parent=5 // pred_region
        %s213 = ssub.s32 %s21, 1
        // Predicated region
        $region13: #{tpu_custom_call.1} parent=11 // pred_check
          %p214 = pneg %p68
        $region14: #{tpu_custom_call.1} parent=11 // pred_check_branch
          %216 = sbr.rel (%p214) target = $region16
        $region15: #{tpu_custom_call.1} parent=11 // pred_region
          %s218 = ssub.s32 1024, 1024
          %219 = vsyncadd [#allocation6], %s218
          %s220 = sshll.u32 [#allocation5], 4
          %s221 = int_to_ptr.vmem [resolvable:$true] %s220
          %226 = dma.hbm_to_vmem [thread:$0]  %s1, 1024, %s221, [#allocation6], 64, 64, 4
        $region16: #{tpu_custom_call.1} parent=11 // pred_fallthru
          _
        // Predicated region
        $region17: #{tpu_custom_call.1} parent=11 // pred_check
          %p227 = pneg %p89
        $region18: #{tpu_custom_call.1} parent=11 // pred_check_branch
          %229 = sbr.rel (%p227) target = $region20
        $region19: #{tpu_custom_call.1} parent=11 // pred_region
          _
        $region20: #{tpu_custom_call.1} parent=11 // pred_fallthru
          _
        // Predicated region
        $region21: #{tpu_custom_call.1} parent=11 // pred_check
          %p230 = pneg %p110
        $region22: #{tpu_custom_call.1} parent=11 // pred_check_branch
          %232 = sbr.rel (%p230) target = $region24
        $region23: #{tpu_custom_call.1} parent=11 // pred_region
          %s234 = ssub.s32 1024, 1024
          %235 = vsyncadd [#allocation6], %s234
          %s236 = sshll.u32 [#allocation7], 4
          %s237 = int_to_ptr.vmem [resolvable:$true] %s236
          %242 = dma.hbm_to_vmem [thread:$0]  %s3, 1024, %s237, [#allocation6], 64, 64, 4
        $region24: #{tpu_custom_call.1} parent=11 // pred_fallthru
          _
        // Predicated region
        $region25: #{tpu_custom_call.1} parent=11 // pred_check
          %p243 = pneg %p131
        $region26: #{tpu_custom_call.1} parent=11 // pred_check_branch
          %245 = sbr.rel (%p243) target = $region28
        $region27: #{tpu_custom_call.1} parent=11 // pred_region
          _
        $region28: #{tpu_custom_call.1} parent=11 // pred_fallthru
          _
        // Predicated region
        $region29: #{tpu_custom_call.1} parent=11 // pred_check
          %p246 = pneg %p152
        $region30: #{tpu_custom_call.1} parent=11 // pred_check_branch
          %248 = sbr.rel (%p246) target = $region32
        $region31: #{tpu_custom_call.1} parent=11 // pred_region
          %s250 = ssub.s32 1024, 1024
          %251 = vsyncadd [#allocation9], %s250
          %s252 = sshll.u32 [#allocation8], 4
          %s253 = int_to_ptr.vmem [resolvable:$true] %s252
          %258 = dma.hbm_to_vmem [thread:$0]  %s5, 1024, %s253, [#allocation9], 64, 64, 4
        $region32: #{tpu_custom_call.1} parent=11 // pred_fallthru
          _
        // Predicated region
        $region33: #{tpu_custom_call.1} parent=11 // pred_check
          %p259 = pneg %p173
        $region34: #{tpu_custom_call.1} parent=11 // pred_check_branch
          %261 = sbr.rel (%p259) target = $region36
        $region35: #{tpu_custom_call.1} parent=11 // pred_region
          _
        $region36: #{tpu_custom_call.1} parent=11 // pred_fallthru
          _
      $region12: #{tpu_custom_call.1} parent=5 // pred_fallthru
        _
      %p262 = scmp.lt.s32.totalorder %s21, 2
      // Predicated region
      $region37: #{tpu_custom_call.1} parent=5 // pred_check
        %p263 = pneg %p262
      $region38: #{tpu_custom_call.1} parent=5 // pred_check_branch
        %265 = sbr.rel (%p263) target = $region40
      $region39: #{tpu_custom_call.1} parent=5 // pred_region
        // Predicated region
        $region41: #{tpu_custom_call.1} parent=39 // pred_check
          %p266 = pneg %p41
        $region42: #{tpu_custom_call.1} parent=39 // pred_check_branch
          %268 = sbr.rel (%p266) target = $region44
        $region43: #{tpu_custom_call.1} parent=39 // pred_region
          %s269 = sand.u32 %s31, 1
          %s270 = scalar_lea.sflag [#allocation3], %s269
          %s271 = sand.u32 %s31, 1
          %s272 = smul.addr %s271, 256
          %s273 = scalar_lea.vmem [#allocation2], %s272
          %s274 = smul.u32 32, %s21
          %s276 = ssub.s32 4096, 4096
          %277 = vsyncadd %s270, %s276
          %s278 = smul.addr %s274, 128
          %s279 = scalar_lea.hbm %s0, %s278
          %s280 = sshll.u32 %s273, 4
          %s281 = int_to_ptr.vmem [resolvable:$true] %s280
          %286 = dma.hbm_to_vmem [thread:$0]  %s279, 4096, %s281, %s270, 128, 128, 8
        $region44: #{tpu_custom_call.1} parent=39 // pred_fallthru
          _
      $region40: #{tpu_custom_call.1} parent=5 // pred_fallthru
        _
      %p287 = scmp.le.s32.totalorder 1, %s21
      %p288 = scmp.lt.s32.totalorder %s21, 3
      %p289 = pnand %p287, %p288
      %p290 = pneg %p289
      // Predicated region
      $region45: #{tpu_custom_call.1} parent=5 // pred_check
        _
      $region46: #{tpu_custom_call.1} parent=5 // pred_check_branch
        %292 = sbr.rel (%p289) target = $region48
      $region47: #{tpu_custom_call.1} parent=5 // pred_region
        %s293 = ssub.s32 %s21, 1
        %s294 = sand.u32 %s34, 1
        %s295 = scalar_lea.sflag [#allocation3], %s294
        %s296 = sand.u32 %s34, 1
        %s297 = smul.addr %s296, 256
        %s298 = scalar_lea.vmem [#allocation2], %s297
        // Predicated region
        $region49: #{tpu_custom_call.1} parent=47 // pred_check
          %p299 = pneg %p47
        $region50: #{tpu_custom_call.1} parent=47 // pred_check_branch
          %301 = sbr.rel (%p299) target = $region52
        $region51: #{tpu_custom_call.1} parent=47 // pred_region
          %302 = dma.done %s295, 4096
        $region52: #{tpu_custom_call.1} parent=47 // pred_fallthru
          _
        // Predicated region
        $region53: #{tpu_custom_call.1} parent=47 // pred_check
          %p303 = pneg %p68
        $region54: #{tpu_custom_call.1} parent=47 // pred_check_branch
          %305 = sbr.rel (%p303) target = $region56
        $region55: #{tpu_custom_call.1} parent=47 // pred_region
          %306 = dma.done [#allocation6], 1024
        $region56: #{tpu_custom_call.1} parent=47 // pred_fallthru
          _
        // Predicated region
        $region57: #{tpu_custom_call.1} parent=47 // pred_check
          %p307 = pneg %p110
        $region58: #{tpu_custom_call.1} parent=47 // pred_check_branch
          %309 = sbr.rel (%p307) target = $region60
        $region59: #{tpu_custom_call.1} parent=47 // pred_region
          %310 = dma.done [#allocation6], 1024
        $region60: #{tpu_custom_call.1} parent=47 // pred_fallthru
          _
        // Predicated region
        $region61: #{tpu_custom_call.1} parent=47 // pred_check
          %p311 = pneg %p152
        $region62: #{tpu_custom_call.1} parent=47 // pred_check_branch
          %313 = sbr.rel (%p311) target = $region64
        $region63: #{tpu_custom_call.1} parent=47 // pred_region
          %314 = dma.done [#allocation9], 1024
        $region64: #{tpu_custom_call.1} parent=47 // pred_fallthru
          _
        %s315 = sand.u32 %s34, 1
        %s316 = scalar_lea.sflag [#allocation3], %s315
        %s317 = sand.u32 %s34, 1
        %s318 = smul.addr %s317, 256
        %s319 = scalar_lea.vmem [#allocation2], %s318
        %p320 = pneg %p47
        %p321 = pneg %p44
        %p322 = pneg %p68
        %p323 = pneg %p65
        %p324 = pneg %p89
        %p325 = pneg %p86
        %p326 = pneg %p110
        %p327 = pneg %p107
        %p328 = pneg %p131
        %p329 = pneg %p128
        %p330 = pneg %p152
        %p331 = pneg %p149
        %p332 = pneg %p173
        %p333 = pneg %p170
        %p334 = pneg %p199
        %p335 = pneg %p196
        %s336 = sand.u32 %s186, 1
        %s337 = scalar_lea.sflag [#allocation4], %s336
        %s338 = sand.u32 %s186, 1
        %s339 = smul.addr %s338, 256
        %s340 = scalar_lea.vmem [#allocation10], %s339
        %s341 = smul.u32 32, %s26
        %s342 = smul.u32 32, %s26
        %v344 = vld [vmem:[%s298] sm:$0xff]
        %v345 = vld [vmem:[%s298 + $0x8] sm:$0xff]
        %v346 = vld [vmem:[%s298 + $0x10] sm:$0xff]
        %v347 = vld [vmem:[%s298 + $0x18] sm:$0xff]
        %v348 = vld [vmem:[%s298 + $0x20] sm:$0xff]
        %v349 = vld [vmem:[%s298 + $0x28] sm:$0xff]
        %v350 = vld [vmem:[%s298 + $0x30] sm:$0xff]
        %v351 = vld [vmem:[%s298 + $0x38] sm:$0xff]
        %v352 = vld [vmem:[%s298 + $0x40] sm:$0xff]
        %v353 = vld [vmem:[%s298 + $0x48] sm:$0xff]
        %v354 = vld [vmem:[%s298 + $0x50] sm:$0xff]
        %v355 = vld [vmem:[%s298 + $0x58] sm:$0xff]
        %v356 = vld [vmem:[%s298 + $0x60] sm:$0xff]
        %v357 = vld [vmem:[%s298 + $0x68] sm:$0xff]
        %v358 = vld [vmem:[%s298 + $0x70] sm:$0xff]
        %v359 = vld [vmem:[%s298 + $0x78] sm:$0xff]
        %v360 = vld [vmem:[%s298 + $0x80] sm:$0xff]
        %v361 = vld [vmem:[%s298 + $0x88] sm:$0xff]
        %v362 = vld [vmem:[%s298 + $0x90] sm:$0xff]
        %v363 = vld [vmem:[%s298 + $0x98] sm:$0xff]
        %v364 = vld [vmem:[%s298 + $0xa0] sm:$0xff]
        %v365 = vld [vmem:[%s298 + $0xa8] sm:$0xff]
        %v366 = vld [vmem:[%s298 + $0xb0] sm:$0xff]
        %v367 = vld [vmem:[%s298 + $0xb8] sm:$0xff]
        %v368 = vld [vmem:[%s298 + $0xc0] sm:$0xff]
        %v369 = vld [vmem:[%s298 + $0xc8] sm:$0xff]
        %v370 = vld [vmem:[%s298 + $0xd0] sm:$0xff]
        %v371 = vld [vmem:[%s298 + $0xd8] sm:$0xff]
        %v372 = vld [vmem:[%s298 + $0xe0] sm:$0xff]
        %v373 = vld [vmem:[%s298 + $0xe8] sm:$0xff]
        %v374 = vld [vmem:[%s298 + $0xf0] sm:$0xff]
        %v375 = vld [vmem:[%s298 + $0xf8] sm:$0xff]
        %v376 = vld [vmem:[#allocation5] sm:$0xf]
        %v377 = vld [vmem:[#allocation5 + $0x4] sm:$0xf]
        %v378 = vld [vmem:[#allocation5 + $0x8] sm:$0xf]
        %v379 = vld [vmem:[#allocation5 + $0xc] sm:$0xf]
        %v380 = vld [vmem:[#allocation5 + $0x10] sm:$0xf]
        %v381 = vld [vmem:[#allocation5 + $0x14] sm:$0xf]
        %v382 = vld [vmem:[#allocation5 + $0x18] sm:$0xf]
        %v383 = vld [vmem:[#allocation5 + $0x1c] sm:$0xf]
        %v384 = vld [vmem:[#allocation5 + $0x20] sm:$0xf]
        %v385 = vld [vmem:[#allocation5 + $0x24] sm:$0xf]
        %v386 = vld [vmem:[#allocation5 + $0x28] sm:$0xf]
        %v387 = vld [vmem:[#allocation5 + $0x2c] sm:$0xf]
        %v388 = vld [vmem:[#allocation5 + $0x30] sm:$0xf]
        %v389 = vld [vmem:[#allocation5 + $0x34] sm:$0xf]
        %v390 = vld [vmem:[#allocation5 + $0x38] sm:$0xf]
        %v391 = vld [vmem:[#allocation5 + $0x3c] sm:$0xf]
        %v392 = vld [vmem:[%s2] sm:$0x1]
        %v393 = vpack.c.bf16 %v345, %v344
        %v394 = vpack.c.bf16 %v347, %v346
        %v395 = vpack.c.bf16 %v349, %v348
        %v396 = vpack.c.bf16 %v351, %v350
        %v397 = vpack.c.bf16 %v353, %v352
        %v398 = vpack.c.bf16 %v355, %v354
        %v399 = vpack.c.bf16 %v357, %v356
        %v400 = vpack.c.bf16 %v359, %v358
        %v401 = vpack.c.bf16 %v361, %v360
        %v402 = vpack.c.bf16 %v363, %v362
        %v403 = vpack.c.bf16 %v365, %v364
        %v404 = vpack.c.bf16 %v367, %v366
        %v405 = vpack.c.bf16 %v369, %v368
        %v406 = vpack.c.bf16 %v371, %v370
        %v407 = vpack.c.bf16 %v373, %v372
        %v408 = vpack.c.bf16 %v375, %v374
        %v410 = vlaneseq
        %v411 = vshrl.u32 %v410, 7
        %v412 = vsub.s32 0, %v411
        %v413 = vrot.slane %v392, %v412
        %v431 = vunpack.c.l.b16 %v376
        %v432 = vunpack.c.l.b16 %v377
        %v433 = vunpack.c.l.b16 %v378
        %v434 = vunpack.c.l.b16 %v379
        %v435 = vunpack.c.l.b16 %v380
        %v436 = vunpack.c.l.b16 %v381
        %v437 = vunpack.c.l.b16 %v382
        %v438 = vunpack.c.l.b16 %v383
        %v439 = vunpack.c.l.b16 %v384
        %v440 = vunpack.c.l.b16 %v385
        %v441 = vunpack.c.l.b16 %v386
        %v442 = vunpack.c.l.b16 %v387
        %v443 = vunpack.c.l.b16 %v388
        %v444 = vunpack.c.l.b16 %v389
        %v445 = vunpack.c.l.b16 %v390
        %v446 = vunpack.c.l.b16 %v391
        %v447 = vpack.c.b16 %v432, %v431
        %v448 = vpack.c.b16 %v434, %v433
        %v449 = vpack.c.b16 %v436, %v435
        %v450 = vpack.c.b16 %v438, %v437
        %v451 = vpack.c.b16 %v440, %v439
        %v452 = vpack.c.b16 %v442, %v441
        %v453 = vpack.c.b16 %v444, %v443
        %v454 = vpack.c.b16 %v446, %v445
        %463 = vmatprep.subr.bf16.mxu0 0
        %464 = vmatpush1.bf16.msra.mxu0 %v447
        %465 = vmatprep.subr.bf16.mxu0 0
        %466 = vmatpush1.bf16.msra.mxu0 %v448
        %467 = vmatprep.subr.bf16.mxu0 0
        %468 = vmatpush1.bf16.msra.mxu0 %v449
        %469 = vmatprep.subr.bf16.mxu0 0
        %470 = vmatpush1.bf16.msra.mxu0 %v450
        %471 = vmatprep.subr.bf16.mxu0 0
        %472 = vmatpush1.bf16.msra.mxu0 %v451
        %473 = vmatprep.subr.bf16.mxu0 0
        %474 = vmatpush1.bf16.msra.mxu0 %v452
        %475 = vmatprep.subr.bf16.mxu0 0
        %476 = vmatpush1.bf16.msra.mxu0 %v453
        %477 = vmatprep.subr.bf16.mxu0 0
        %478 = vmatpush1.bf16.msra.mxu0 %v454
        %479 = vmatprep.subr.bf16.mxu0 0
        %480 = vmatpush1.bf16.msra.mxu0 0
        %481 = vmatprep.subr.bf16.mxu0 0
        %482 = vmatpush1.bf16.msra.mxu0 0
        %483 = vmatprep.subr.bf16.mxu0 0
        %484 = vmatpush1.bf16.msra.mxu0 0
        %485 = vmatprep.subr.bf16.mxu0 0
        %486 = vmatpush1.bf16.msra.mxu0 0
        %487 = vmatprep.subr.bf16.mxu0 0
        %488 = vmatpush1.bf16.msra.mxu0 0
        %489 = vmatprep.subr.bf16.mxu0 0
        %490 = vmatpush1.bf16.msra.mxu0 0
        %491 = vmatprep.subr.bf16.mxu0 0
        %492 = vmatpush1.bf16.msra.mxu0 0
        %493 = vmatprep.subr.bf16.mxu0 0
        %494 = vmatpush1.bf16.msra.mxu0 0
        %495 = vmatprep.mubr.bf16.mxu0 0
        %496 = vmatmul.mubr.bf16.gmra.mrb[0].mxu0 %v393
        %v497 = vpop.f32.mrb[0].mxu0
        %v498 = vadd.f32 %v413, %v497
        %v499 = vpop.f32.mrb[0].mxu0
        %v500 = vpop.f32.mrb[0].mxu0
        %v501 = vadd.f32 %v413, %v500
        %v502 = vpop.f32.mrb[0].mxu0
        %503 = vmatprep.mubr.bf16.mxu0 0
        %504 = vmatmul.mubr.bf16.gmra.mrb[0].mxu0 %v394
        %v505 = vpop.f32.mrb[0].mxu0
        %v506 = vadd.f32 %v413, %v505
        %v507 = vpop.f32.mrb[0].mxu0
        %v508 = vpop.f32.mrb[0].mxu0
        %v509 = vadd.f32 %v413, %v508
        %v510 = vpop.f32.mrb[0].mxu0
        %511 = vmatprep.mubr.bf16.mxu0 0
        %512 = vmatmul.mubr.bf16.gmra.mrb[0].mxu0 %v395
        %v513 = vpop.f32.mrb[0].mxu0
        %v514 = vadd.f32 %v413, %v513
        %v515 = vpop.f32.mrb[0].mxu0
        %v516 = vpop.f32.mrb[0].mxu0
        %v517 = vadd.f32 %v413, %v516
        %v518 = vpop.f32.mrb[0].mxu0
        %519 = vmatprep.mubr.bf16.mxu0 0
        %520 = vmatmul.mubr.bf16.gmra.mrb[0].mxu0 %v396
        %v521 = vpop.f32.mrb[0].mxu0
        %v522 = vadd.f32 %v413, %v521
        %v523 = vpop.f32.mrb[0].mxu0
        %v524 = vpop.f32.mrb[0].mxu0
        %v525 = vadd.f32 %v413, %v524
        %v526 = vpop.f32.mrb[0].mxu0
        %527 = vmatprep.mubr.bf16.mxu0 0
        %528 = vmatmul.mubr.bf16.gmra.mrb[0].mxu0 %v397
        %v529 = vpop.f32.mrb[0].mxu0
        %v530 = vadd.f32 %v413, %v529
        %v531 = vpop.f32.mrb[0].mxu0
        %v532 = vpop.f32.mrb[0].mxu0
        %v533 = vadd.f32 %v413, %v532
        %v534 = vpop.f32.mrb[0].mxu0
        %535 = vmatprep.mubr.bf16.mxu0 0
        %536 = vmatmul.mubr.bf16.gmra.mrb[0].mxu0 %v398
        %v537 = vpop.f32.mrb[0].mxu0
        %v538 = vadd.f32 %v413, %v537
        %v539 = vpop.f32.mrb[0].mxu0
        %v540 = vpop.f32.mrb[0].mxu0
        %v541 = vadd.f32 %v413, %v540
        %v542 = vpop.f32.mrb[0].mxu0
        %543 = vmatprep.mubr.bf16.mxu0 0
        %544 = vmatmul.mubr.bf16.gmra.mrb[0].mxu0 %v399
        %v545 = vpop.f32.mrb[0].mxu0
        %v546 = vadd.f32 %v413, %v545
        %v547 = vpop.f32.mrb[0].mxu0
        %v548 = vpop.f32.mrb[0].mxu0
        %v549 = vadd.f32 %v413, %v548
        %v550 = vpop.f32.mrb[0].mxu0
        %551 = vmatprep.mubr.bf16.mxu0 0
        %552 = vmatmul.mubr.bf16.gmra.mrb[0].mxu0 %v400
        %v553 = vpop.f32.mrb[0].mxu0
        %v554 = vadd.f32 %v413, %v553
        %v555 = vpop.f32.mrb[0].mxu0
        %v556 = vpop.f32.mrb[0].mxu0
        %v557 = vadd.f32 %v413, %v556
        %v558 = vpop.f32.mrb[0].mxu0
        %559 = vmatprep.mubr.bf16.mxu0 0
        %560 = vmatmul.mubr.bf16.gmra.mrb[0].mxu0 %v401
        %v561 = vpop.f32.mrb[0].mxu0
        %v562 = vadd.f32 %v413, %v561
        %v563 = vpop.f32.mrb[0].mxu0
        %v564 = vpop.f32.mrb[0].mxu0
        %v565 = vadd.f32 %v413, %v564
        %v566 = vpop.f32.mrb[0].mxu0
        %567 = vmatprep.mubr.bf16.mxu0 0
        %568 = vmatmul.mubr.bf16.gmra.mrb[0].mxu0 %v402
        %v569 = vpop.f32.mrb[0].mxu0
        %v570 = vadd.f32 %v413, %v569
        %v571 = vpop.f32.mrb[0].mxu0
        %v572 = vpop.f32.mrb[0].mxu0
        %v573 = vadd.f32 %v413, %v572
        %v574 = vpop.f32.mrb[0].mxu0
        %575 = vmatprep.mubr.bf16.mxu0 0
        %576 = vmatmul.mubr.bf16.gmra.mrb[0].mxu0 %v403
        %v577 = vpop.f32.mrb[0].mxu0
        %v578 = vadd.f32 %v413, %v577
        %v579 = vpop.f32.mrb[0].mxu0
        %v580 = vpop.f32.mrb[0].mxu0
        %v581 = vadd.f32 %v413, %v580
        %v582 = vpop.f32.mrb[0].mxu0
        %583 = vmatprep.mubr.bf16.mxu0 0
        %584 = vmatmul.mubr.bf16.gmra.mrb[0].mxu0 %v404
        %v585 = vpop.f32.mrb[0].mxu0
        %v586 = vadd.f32 %v413, %v585
        %v587 = vpop.f32.mrb[0].mxu0
        %v588 = vpop.f32.mrb[0].mxu0
        %v589 = vadd.f32 %v413, %v588
        %v590 = vpop.f32.mrb[0].mxu0
        %591 = vmatprep.mubr.bf16.mxu0 0
        %592 = vmatmul.mubr.bf16.gmra.mrb[0].mxu0 %v405
        %v593 = vpop.f32.mrb[0].mxu0
        %v594 = vadd.f32 %v413, %v593
        %v595 = vpop.f32.mrb[0].mxu0
        %v596 = vpop.f32.mrb[0].mxu0
        %v597 = vadd.f32 %v413, %v596
        %v598 = vpop.f32.mrb[0].mxu0
        %599 = vmatprep.mubr.bf16.mxu0 0
        %600 = vmatmul.mubr.bf16.gmra.mrb[0].mxu0 %v406
        %v601 = vpop.f32.mrb[0].mxu0
        %v602 = vadd.f32 %v413, %v601
        %v603 = vpop.f32.mrb[0].mxu0
        %v604 = vpop.f32.mrb[0].mxu0
        %v605 = vadd.f32 %v413, %v604
        %v606 = vpop.f32.mrb[0].mxu0
        %607 = vmatprep.mubr.bf16.mxu0 0
        %608 = vmatmul.mubr.bf16.gmra.mrb[0].mxu0 %v407
        %v609 = vpop.f32.mrb[0].mxu0
        %v610 = vadd.f32 %v413, %v609
        %v611 = vpop.f32.mrb[0].mxu0
        %v612 = vpop.f32.mrb[0].mxu0
        %v613 = vadd.f32 %v413, %v612
        %v614 = vpop.f32.mrb[0].mxu0
        %615 = vmatprep.mubr.bf16.mxu0 0
        %616 = vmatmul.mubr.bf16.gmra.mrb[0].mxu0 %v408
        %v617 = vpop.f32.mrb[0].mxu0
        %v618 = vadd.f32 %v413, %v617
        %v619 = vpop.f32.mrb[0].mxu0
        %v620 = vpop.f32.mrb[0].mxu0
        %v621 = vadd.f32 %v413, %v620
        %v622 = vpop.f32.mrb[0].mxu0
        %623 = vdwg.mxu0
        %v624 = vmax.f32 %v498, 0.0
        %v625 = vmax.f32 %v501, 0.0
        %v626 = vmax.f32 %v506, 0.0
        %v627 = vmax.f32 %v509, 0.0
        %v628 = vmax.f32 %v514, 0.0
        %v629 = vmax.f32 %v517, 0.0
        %v630 = vmax.f32 %v522, 0.0
        %v631 = vmax.f32 %v525, 0.0
        %v632 = vmax.f32 %v530, 0.0
        %v633 = vmax.f32 %v533, 0.0
        %v634 = vmax.f32 %v538, 0.0
        %v635 = vmax.f32 %v541, 0.0
        %v636 = vmax.f32 %v546, 0.0
        %v637 = vmax.f32 %v549, 0.0
        %v638 = vmax.f32 %v554, 0.0
        %v639 = vmax.f32 %v557, 0.0
        %v640 = vmax.f32 %v562, 0.0
        %v641 = vmax.f32 %v565, 0.0
        %v642 = vmax.f32 %v570, 0.0
        %v643 = vmax.f32 %v573, 0.0
        %v644 = vmax.f32 %v578, 0.0
        %v645 = vmax.f32 %v581, 0.0
        %v646 = vmax.f32 %v586, 0.0
        %v647 = vmax.f32 %v589, 0.0
        %v648 = vmax.f32 %v594, 0.0
        %v649 = vmax.f32 %v597, 0.0
        %v650 = vmax.f32 %v602, 0.0
        %v651 = vmax.f32 %v605, 0.0
        %v652 = vmax.f32 %v610, 0.0
        %v653 = vmax.f32 %v613, 0.0
        %v654 = vmax.f32 %v618, 0.0
        %v655 = vmax.f32 %v621, 0.0
        %v656 = vld [vmem:[#allocation7] sm:$0xf]
        %v657 = vld [vmem:[#allocation7 + $0x4] sm:$0xf]
        %v658 = vld [vmem:[#allocation7 + $0x8] sm:$0xf]
        %v659 = vld [vmem:[#allocation7 + $0xc] sm:$0xf]
        %v660 = vld [vmem:[#allocation7 + $0x10] sm:$0xf]
        %v661 = vld [vmem:[#allocation7 + $0x14] sm:$0xf]
        %v662 = vld [vmem:[#allocation7 + $0x18] sm:$0xf]
        %v663 = vld [vmem:[#allocation7 + $0x1c] sm:$0xf]
        %v664 = vld [vmem:[#allocation7 + $0x20] sm:$0xf]
        %v665 = vld [vmem:[#allocation7 + $0x24] sm:$0xf]
        %v666 = vld [vmem:[#allocation7 + $0x28] sm:$0xf]
        %v667 = vld [vmem:[#allocation7 + $0x2c] sm:$0xf]
        %v668 = vld [vmem:[#allocation7 + $0x30] sm:$0xf]
        %v669 = vld [vmem:[#allocation7 + $0x34] sm:$0xf]
        %v670 = vld [vmem:[#allocation7 + $0x38] sm:$0xf]
        %v671 = vld [vmem:[#allocation7 + $0x3c] sm:$0xf]
        %v672 = vld [vmem:[%s4] sm:$0x1]
        %v673 = vpack.c.bf16 %v625, %v624
        %v674 = vpack.c.bf16 %v627, %v626
        %v675 = vpack.c.bf16 %v629, %v628
        %v676 = vpack.c.bf16 %v631, %v630
        %v677 = vpack.c.bf16 %v633, %v632
        %v678 = vpack.c.bf16 %v635, %v634
        %v679 = vpack.c.bf16 %v637, %v636
        %v680 = vpack.c.bf16 %v639, %v638
        %v681 = vpack.c.bf16 %v641, %v640
        %v682 = vpack.c.bf16 %v643, %v642
        %v683 = vpack.c.bf16 %v645, %v644
        %v684 = vpack.c.bf16 %v647, %v646
        %v685 = vpack.c.bf16 %v649, %v648
        %v686 = vpack.c.bf16 %v651, %v650
        %v687 = vpack.c.bf16 %v653, %v652
        %v688 = vpack.c.bf16 %v655, %v654
        %v690 = vlaneseq
        %v691 = vshrl.u32 %v690, 7
        %v692 = vsub.s32 0, %v691
        %v693 = vrot.slane %v672, %v692
        %v711 = vunpack.c.l.b16 %v656
        %v712 = vunpack.c.l.b16 %v657
        %v713 = vunpack.c.l.b16 %v658
        %v714 = vunpack.c.l.b16 %v659
        %v715 = vunpack.c.l.b16 %v660
        %v716 = vunpack.c.l.b16 %v661
        %v717 = vunpack.c.l.b16 %v662
        %v718 = vunpack.c.l.b16 %v663
        %v719 = vunpack.c.l.b16 %v664
        %v720 = vunpack.c.l.b16 %v665
        %v721 = vunpack.c.l.b16 %v666
        %v722 = vunpack.c.l.b16 %v667
        %v723 = vunpack.c.l.b16 %v668
        %v724 = vunpack.c.l.b16 %v669
        %v725 = vunpack.c.l.b16 %v670
        %v726 = vunpack.c.l.b16 %v671
        %v727 = vpack.c.b16 %v712, %v711
        %v728 = vpack.c.b16 %v714, %v713
        %v729 = vpack.c.b16 %v716, %v715
        %v730 = vpack.c.b16 %v718, %v717
        %v731 = vpack.c.b16 %v720, %v719
        %v732 = vpack.c.b16 %v722, %v721
        %v733 = vpack.c.b16 %v724, %v723
        %v734 = vpack.c.b16 %v726, %v725
        %743 = vmatprep.subr.bf16.mxu0 0
        %744 = vmatpush1.bf16.msra.mxu0 %v727
        %745 = vmatprep.subr.bf16.mxu0 0
        %746 = vmatpush1.bf16.msra.mxu0 %v728
        %747 = vmatprep.subr.bf16.mxu0 0
        %748 = vmatpush1.bf16.msra.mxu0 %v729
        %749 = vmatprep.subr.bf16.mxu0 0
        %750 = vmatpush1.bf16.msra.mxu0 %v730
        %751 = vmatprep.subr.bf16.mxu0 0
        %752 = vmatpush1.bf16.msra.mxu0 %v731
        %753 = vmatprep.subr.bf16.mxu0 0
        %754 = vmatpush1.bf16.msra.mxu0 %v732
        %755 = vmatprep.subr.bf16.mxu0 0
        %756 = vmatpush1.bf16.msra.mxu0 %v733
        %757 = vmatprep.subr.bf16.mxu0 0
        %758 = vmatpush1.bf16.msra.mxu0 %v734
        %759 = vmatprep.subr.bf16.mxu0 0
        %760 = vmatpush1.bf16.msra.mxu0 0
        %761 = vmatprep.subr.bf16.mxu0 0
        %762 = vmatpush1.bf16.msra.mxu0 0
        %763 = vmatprep.subr.bf16.mxu0 0
        %764 = vmatpush1.bf16.msra.mxu0 0
        %765 = vmatprep.subr.bf16.mxu0 0
        %766 = vmatpush1.bf16.msra.mxu0 0
        %767 = vmatprep.subr.bf16.mxu0 0
        %768 = vmatpush1.bf16.msra.mxu0 0
        %769 = vmatprep.subr.bf16.mxu0 0
        %770 = vmatpush1.bf16.msra.mxu0 0
        %771 = vmatprep.subr.bf16.mxu0 0
        %772 = vmatpush1.bf16.msra.mxu0 0
        %773 = vmatprep.subr.bf16.mxu0 0
        %774 = vmatpush1.bf16.msra.mxu0 0
        %775 = vmatprep.mubr.bf16.mxu0 0
        %776 = vmatmul.mubr.bf16.gmra.mrb[0].mxu0 %v673
        %v777 = vpop.f32.mrb[0].mxu0
        %v778 = vadd.f32 %v693, %v777
        %v779 = vpop.f32.mrb[0].mxu0
        %v780 = vpop.f32.mrb[0].mxu0
        %v781 = vadd.f32 %v693, %v780
        %v782 = vpop.f32.mrb[0].mxu0
        %783 = vmatprep.mubr.bf16.mxu0 0
        %784 = vmatmul.mubr.bf16.gmra.mrb[0].mxu0 %v674
        %v785 = vpop.f32.mrb[0].mxu0
        %v786 = vadd.f32 %v693, %v785
        %v787 = vpop.f32.mrb[0].mxu0
        %v788 = vpop.f32.mrb[0].mxu0
        %v789 = vadd.f32 %v693, %v788
        %v790 = vpop.f32.mrb[0].mxu0
        %791 = vmatprep.mubr.bf16.mxu0 0
        %792 = vmatmul.mubr.bf16.gmra.mrb[0].mxu0 %v675
        %v793 = vpop.f32.mrb[0].mxu0
        %v794 = vadd.f32 %v693, %v793
        %v795 = vpop.f32.mrb[0].mxu0
        %v796 = vpop.f32.mrb[0].mxu0
        %v797 = vadd.f32 %v693, %v796
        %v798 = vpop.f32.mrb[0].mxu0
        %799 = vmatprep.mubr.bf16.mxu0 0
        %800 = vmatmul.mubr.bf16.gmra.mrb[0].mxu0 %v676
        %v801 = vpop.f32.mrb[0].mxu0
        %v802 = vadd.f32 %v693, %v801
        %v803 = vpop.f32.mrb[0].mxu0
        %v804 = vpop.f32.mrb[0].mxu0
        %v805 = vadd.f32 %v693, %v804
        %v806 = vpop.f32.mrb[0].mxu0
        %807 = vmatprep.mubr.bf16.mxu0 0
        %808 = vmatmul.mubr.bf16.gmra.mrb[0].mxu0 %v677
        %v809 = vpop.f32.mrb[0].mxu0
        %v810 = vadd.f32 %v693, %v809
        %v811 = vpop.f32.mrb[0].mxu0
        %v812 = vpop.f32.mrb[0].mxu0
        %v813 = vadd.f32 %v693, %v812
        %v814 = vpop.f32.mrb[0].mxu0
        %815 = vmatprep.mubr.bf16.mxu0 0
        %816 = vmatmul.mubr.bf16.gmra.mrb[0].mxu0 %v678
        %v817 = vpop.f32.mrb[0].mxu0
        %v818 = vadd.f32 %v693, %v817
        %v819 = vpop.f32.mrb[0].mxu0
        %v820 = vpop.f32.mrb[0].mxu0
        %v821 = vadd.f32 %v693, %v820
        %v822 = vpop.f32.mrb[0].mxu0
        %823 = vmatprep.mubr.bf16.mxu0 0
        %824 = vmatmul.mubr.bf16.gmra.mrb[0].mxu0 %v679
        %v825 = vpop.f32.mrb[0].mxu0
        %v826 = vadd.f32 %v693, %v825
        %v827 = vpop.f32.mrb[0].mxu0
        %v828 = vpop.f32.mrb[0].mxu0
        %v829 = vadd.f32 %v693, %v828
        %v830 = vpop.f32.mrb[0].mxu0
        %831 = vmatprep.mubr.bf16.mxu0 0
        %832 = vmatmul.mubr.bf16.gmra.mrb[0].mxu0 %v680
        %v833 = vpop.f32.mrb[0].mxu0
        %v834 = vadd.f32 %v693, %v833
        %v835 = vpop.f32.mrb[0].mxu0
        %v836 = vpop.f32.mrb[0].mxu0
        %v837 = vadd.f32 %v693, %v836
        %v838 = vpop.f32.mrb[0].mxu0
        %839 = vmatprep.mubr.bf16.mxu0 0
        %840 = vmatmul.mubr.bf16.gmra.mrb[0].mxu0 %v681
        %v841 = vpop.f32.mrb[0].mxu0
        %v842 = vadd.f32 %v693, %v841
        %v843 = vpop.f32.mrb[0].mxu0
        %v844 = vpop.f32.mrb[0].mxu0
        %v845 = vadd.f32 %v693, %v844
        %v846 = vpop.f32.mrb[0].mxu0
        %847 = vmatprep.mubr.bf16.mxu0 0
        %848 = vmatmul.mubr.bf16.gmra.mrb[0].mxu0 %v682
        %v849 = vpop.f32.mrb[0].mxu0
        %v850 = vadd.f32 %v693, %v849
        %v851 = vpop.f32.mrb[0].mxu0
        %v852 = vpop.f32.mrb[0].mxu0
        %v853 = vadd.f32 %v693, %v852
        %v854 = vpop.f32.mrb[0].mxu0
        %855 = vmatprep.mubr.bf16.mxu0 0
        %856 = vmatmul.mubr.bf16.gmra.mrb[0].mxu0 %v683
        %v857 = vpop.f32.mrb[0].mxu0
        %v858 = vadd.f32 %v693, %v857
        %v859 = vpop.f32.mrb[0].mxu0
        %v860 = vpop.f32.mrb[0].mxu0
        %v861 = vadd.f32 %v693, %v860
        %v862 = vpop.f32.mrb[0].mxu0
        %863 = vmatprep.mubr.bf16.mxu0 0
        %864 = vmatmul.mubr.bf16.gmra.mrb[0].mxu0 %v684
        %v865 = vpop.f32.mrb[0].mxu0
        %v866 = vadd.f32 %v693, %v865
        %v867 = vpop.f32.mrb[0].mxu0
        %v868 = vpop.f32.mrb[0].mxu0
        %v869 = vadd.f32 %v693, %v868
        %v870 = vpop.f32.mrb[0].mxu0
        %871 = vmatprep.mubr.bf16.mxu0 0
        %872 = vmatmul.mubr.bf16.gmra.mrb[0].mxu0 %v685
        %v873 = vpop.f32.mrb[0].mxu0
        %v874 = vadd.f32 %v693, %v873
        %v875 = vpop.f32.mrb[0].mxu0
        %v876 = vpop.f32.mrb[0].mxu0
        %v877 = vadd.f32 %v693, %v876
        %v878 = vpop.f32.mrb[0].mxu0
        %879 = vmatprep.mubr.bf16.mxu0 0
        %880 = vmatmul.mubr.bf16.gmra.mrb[0].mxu0 %v686
        %v881 = vpop.f32.mrb[0].mxu0
        %v882 = vadd.f32 %v693, %v881
        %v883 = vpop.f32.mrb[0].mxu0
        %v884 = vpop.f32.mrb[0].mxu0
        %v885 = vadd.f32 %v693, %v884
        %v886 = vpop.f32.mrb[0].mxu0
        %887 = vmatprep.mubr.bf16.mxu0 0
        %888 = vmatmul.mubr.bf16.gmra.mrb[0].mxu0 %v687
        %v889 = vpop.f32.mrb[0].mxu0
        %v890 = vadd.f32 %v693, %v889
        %v891 = vpop.f32.mrb[0].mxu0
        %v892 = vpop.f32.mrb[0].mxu0
        %v893 = vadd.f32 %v693, %v892
        %v894 = vpop.f32.mrb[0].mxu0
        %895 = vmatprep.mubr.bf16.mxu0 0
        %896 = vmatmul.mubr.bf16.gmra.mrb[0].mxu0 %v688
        %v897 = vpop.f32.mrb[0].mxu0
        %v898 = vadd.f32 %v693, %v897
        %v899 = vpop.f32.mrb[0].mxu0
        %v900 = vpop.f32.mrb[0].mxu0
        %v901 = vadd.f32 %v693, %v900
        %v902 = vpop.f32.mrb[0].mxu0
        %903 = vdwg.mxu0
        %v904 = vmax.f32 %v778, 0.0
        %v905 = vmax.f32 %v781, 0.0
        %v906 = vmax.f32 %v786, 0.0
        %v907 = vmax.f32 %v789, 0.0
        %v908 = vmax.f32 %v794, 0.0
        %v909 = vmax.f32 %v797, 0.0
        %v910 = vmax.f32 %v802, 0.0
        %v911 = vmax.f32 %v805, 0.0
        %v912 = vmax.f32 %v810, 0.0
        %v913 = vmax.f32 %v813, 0.0
        %v914 = vmax.f32 %v818, 0.0
        %v915 = vmax.f32 %v821, 0.0
        %v916 = vmax.f32 %v826, 0.0
        %v917 = vmax.f32 %v829, 0.0
        %v918 = vmax.f32 %v834, 0.0
        %v919 = vmax.f32 %v837, 0.0
        %v920 = vmax.f32 %v842, 0.0
        %v921 = vmax.f32 %v845, 0.0
        %v922 = vmax.f32 %v850, 0.0
        %v923 = vmax.f32 %v853, 0.0
        %v924 = vmax.f32 %v858, 0.0
        %v925 = vmax.f32 %v861, 0.0
        %v926 = vmax.f32 %v866, 0.0
        %v927 = vmax.f32 %v869, 0.0
        %v928 = vmax.f32 %v874, 0.0
        %v929 = vmax.f32 %v877, 0.0
        %v930 = vmax.f32 %v882, 0.0
        %v931 = vmax.f32 %v885, 0.0
        %v932 = vmax.f32 %v890, 0.0
        %v933 = vmax.f32 %v893, 0.0
        %v934 = vmax.f32 %v898, 0.0
        %v935 = vmax.f32 %v901, 0.0
        %v936 = vld [vmem:[#allocation8] sm:$0xf]
        %v937 = vld [vmem:[#allocation8 + $0x4] sm:$0xf]
        %v938 = vld [vmem:[#allocation8 + $0x8] sm:$0xf]
        %v939 = vld [vmem:[#allocation8 + $0xc] sm:$0xf]
        %v940 = vld [vmem:[#allocation8 + $0x10] sm:$0xf]
        %v941 = vld [vmem:[#allocation8 + $0x14] sm:$0xf]
        %v942 = vld [vmem:[#allocation8 + $0x18] sm:$0xf]
        %v943 = vld [vmem:[#allocation8 + $0x1c] sm:$0xf]
        %v944 = vld [vmem:[#allocation8 + $0x20] sm:$0xf]
        %v945 = vld [vmem:[#allocation8 + $0x24] sm:$0xf]
        %v946 = vld [vmem:[#allocation8 + $0x28] sm:$0xf]
        %v947 = vld [vmem:[#allocation8 + $0x2c] sm:$0xf]
        %v948 = vld [vmem:[#allocation8 + $0x30] sm:$0xf]
        %v949 = vld [vmem:[#allocation8 + $0x34] sm:$0xf]
        %v950 = vld [vmem:[#allocation8 + $0x38] sm:$0xf]
        %v951 = vld [vmem:[#allocation8 + $0x3c] sm:$0xf]
        %v952 = vld [vmem:[%s6] sm:$0x1]
        %v953 = vpack.c.bf16 %v905, %v904
        %v954 = vpack.c.bf16 %v907, %v906
        %v955 = vpack.c.bf16 %v909, %v908
        %v956 = vpack.c.bf16 %v911, %v910
        %v957 = vpack.c.bf16 %v913, %v912
        %v958 = vpack.c.bf16 %v915, %v914
        %v959 = vpack.c.bf16 %v917, %v916
        %v960 = vpack.c.bf16 %v919, %v918
        %v961 = vpack.c.bf16 %v921, %v920
        %v962 = vpack.c.bf16 %v923, %v922
        %v963 = vpack.c.bf16 %v925, %v924
        %v964 = vpack.c.bf16 %v927, %v926
        %v965 = vpack.c.bf16 %v929, %v928
        %v966 = vpack.c.bf16 %v931, %v930
        %v967 = vpack.c.bf16 %v933, %v932
        %v968 = vpack.c.bf16 %v935, %v934
        %v970 = vlaneseq
        %v971 = vshrl.u32 %v970, 7
        %v972 = vsub.s32 0, %v971
        %v973 = vrot.slane %v952, %v972
        %v991 = vunpack.c.l.b16 %v936
        %v992 = vunpack.c.l.b16 %v937
        %v993 = vunpack.c.l.b16 %v938
        %v994 = vunpack.c.l.b16 %v939
        %v995 = vunpack.c.l.b16 %v940
        %v996 = vunpack.c.l.b16 %v941
        %v997 = vunpack.c.l.b16 %v942
        %v998 = vunpack.c.l.b16 %v943
        %v999 = vunpack.c.l.b16 %v944
        %v1000 = vunpack.c.l.b16 %v945
        %v1001 = vunpack.c.l.b16 %v946
        %v1002 = vunpack.c.l.b16 %v947
        %v1003 = vunpack.c.l.b16 %v948
        %v1004 = vunpack.c.l.b16 %v949
        %v1005 = vunpack.c.l.b16 %v950
        %v1006 = vunpack.c.l.b16 %v951
        %v1007 = vpack.c.b16 %v992, %v991
        %v1008 = vpack.c.b16 %v994, %v993
        %v1009 = vpack.c.b16 %v996, %v995
        %v1010 = vpack.c.b16 %v998, %v997
        %v1011 = vpack.c.b16 %v1000, %v999
        %v1012 = vpack.c.b16 %v1002, %v1001
        %v1013 = vpack.c.b16 %v1004, %v1003
        %v1014 = vpack.c.b16 %v1006, %v1005
        %1023 = vmatprep.subr.bf16.mxu0 0
        %1024 = vmatpush1.bf16.msra.mxu0 %v1007
        %1025 = vmatprep.subr.bf16.mxu0 0
        %1026 = vmatpush1.bf16.msra.mxu0 %v1008
        %1027 = vmatprep.subr.bf16.mxu0 0
        %1028 = vmatpush1.bf16.msra.mxu0 %v1009
        %1029 = vmatprep.subr.bf16.mxu0 0
        %1030 = vmatpush1.bf16.msra.mxu0 %v1010
        %1031 = vmatprep.subr.bf16.mxu0 0
        %1032 = vmatpush1.bf16.msra.mxu0 %v1011
        %1033 = vmatprep.subr.bf16.mxu0 0
        %1034 = vmatpush1.bf16.msra.mxu0 %v1012
        %1035 = vmatprep.subr.bf16.mxu0 0
        %1036 = vmatpush1.bf16.msra.mxu0 %v1013
        %1037 = vmatprep.subr.bf16.mxu0 0
        %1038 = vmatpush1.bf16.msra.mxu0 %v1014
        %1039 = vmatprep.subr.bf16.mxu0 0
        %1040 = vmatpush1.bf16.msra.mxu0 0
        %1041 = vmatprep.subr.bf16.mxu0 0
        %1042 = vmatpush1.bf16.msra.mxu0 0
        %1043 = vmatprep.subr.bf16.mxu0 0
        %1044 = vmatpush1.bf16.msra.mxu0 0
        %1045 = vmatprep.subr.bf16.mxu0 0
        %1046 = vmatpush1.bf16.msra.mxu0 0
        %1047 = vmatprep.subr.bf16.mxu0 0
        %1048 = vmatpush1.bf16.msra.mxu0 0
        %1049 = vmatprep.subr.bf16.mxu0 0
        %1050 = vmatpush1.bf16.msra.mxu0 0
        %1051 = vmatprep.subr.bf16.mxu0 0
        %1052 = vmatpush1.bf16.msra.mxu0 0
        %1053 = vmatprep.subr.bf16.mxu0 0
        %1054 = vmatpush1.bf16.msra.mxu0 0
        %1055 = vmatprep.mubr.bf16.mxu0 0
        %1056 = vmatmul.mubr.bf16.gmra.mrb[0].mxu0 %v953
        %v1057 = vpop.f32.mrb[0].mxu0
        %v1058 = vadd.f32 %v973, %v1057
        %v1059 = vpop.f32.mrb[0].mxu0
        %v1060 = vpop.f32.mrb[0].mxu0
        %v1061 = vadd.f32 %v973, %v1060
        %v1062 = vpop.f32.mrb[0].mxu0
        %1063 = vmatprep.mubr.bf16.mxu0 0
        %1064 = vmatmul.mubr.bf16.gmra.mrb[0].mxu0 %v954
        %v1065 = vpop.f32.mrb[0].mxu0
        %v1066 = vadd.f32 %v973, %v1065
        %v1067 = vpop.f32.mrb[0].mxu0
        %v1068 = vpop.f32.mrb[0].mxu0
        %v1069 = vadd.f32 %v973, %v1068
        %v1070 = vpop.f32.mrb[0].mxu0
        %1071 = vmatprep.mubr.bf16.mxu0 0
        %1072 = vmatmul.mubr.bf16.gmra.mrb[0].mxu0 %v955
        %v1073 = vpop.f32.mrb[0].mxu0
        %v1074 = vadd.f32 %v973, %v1073
        %v1075 = vpop.f32.mrb[0].mxu0
        %v1076 = vpop.f32.mrb[0].mxu0
        %v1077 = vadd.f32 %v973, %v1076
        %v1078 = vpop.f32.mrb[0].mxu0
        %1079 = vmatprep.mubr.bf16.mxu0 0
        %1080 = vmatmul.mubr.bf16.gmra.mrb[0].mxu0 %v956
        %v1081 = vpop.f32.mrb[0].mxu0
        %v1082 = vadd.f32 %v973, %v1081
        %v1083 = vpop.f32.mrb[0].mxu0
        %v1084 = vpop.f32.mrb[0].mxu0
        %v1085 = vadd.f32 %v973, %v1084
        %v1086 = vpop.f32.mrb[0].mxu0
        %1087 = vmatprep.mubr.bf16.mxu0 0
        %1088 = vmatmul.mubr.bf16.gmra.mrb[0].mxu0 %v957
        %v1089 = vpop.f32.mrb[0].mxu0
        %v1090 = vadd.f32 %v973, %v1089
        %v1091 = vpop.f32.mrb[0].mxu0
        %v1092 = vpop.f32.mrb[0].mxu0
        %v1093 = vadd.f32 %v973, %v1092
        %v1094 = vpop.f32.mrb[0].mxu0
        %1095 = vmatprep.mubr.bf16.mxu0 0
        %1096 = vmatmul.mubr.bf16.gmra.mrb[0].mxu0 %v958
        %v1097 = vpop.f32.mrb[0].mxu0
        %v1098 = vadd.f32 %v973, %v1097
        %v1099 = vpop.f32.mrb[0].mxu0
        %v1100 = vpop.f32.mrb[0].mxu0
        %v1101 = vadd.f32 %v973, %v1100
        %v1102 = vpop.f32.mrb[0].mxu0
        %1103 = vmatprep.mubr.bf16.mxu0 0
        %1104 = vmatmul.mubr.bf16.gmra.mrb[0].mxu0 %v959
        %v1105 = vpop.f32.mrb[0].mxu0
        %v1106 = vadd.f32 %v973, %v1105
        %v1107 = vpop.f32.mrb[0].mxu0
        %v1108 = vpop.f32.mrb[0].mxu0
        %v1109 = vadd.f32 %v973, %v1108
        %v1110 = vpop.f32.mrb[0].mxu0
        %1111 = vmatprep.mubr.bf16.mxu0 0
        %1112 = vmatmul.mubr.bf16.gmra.mrb[0].mxu0 %v960
        %v1113 = vpop.f32.mrb[0].mxu0
        %v1114 = vadd.f32 %v973, %v1113
        %v1115 = vpop.f32.mrb[0].mxu0
        %v1116 = vpop.f32.mrb[0].mxu0
        %v1117 = vadd.f32 %v973, %v1116
        %v1118 = vpop.f32.mrb[0].mxu0
        %1119 = vmatprep.mubr.bf16.mxu0 0
        %1120 = vmatmul.mubr.bf16.gmra.mrb[0].mxu0 %v961
        %v1121 = vpop.f32.mrb[0].mxu0
        %v1122 = vadd.f32 %v973, %v1121
        %v1123 = vpop.f32.mrb[0].mxu0
        %v1124 = vpop.f32.mrb[0].mxu0
        %v1125 = vadd.f32 %v973, %v1124
        %v1126 = vpop.f32.mrb[0].mxu0
        %1127 = vmatprep.mubr.bf16.mxu0 0
        %1128 = vmatmul.mubr.bf16.gmra.mrb[0].mxu0 %v962
        %v1129 = vpop.f32.mrb[0].mxu0
        %v1130 = vadd.f32 %v973, %v1129
        %v1131 = vpop.f32.mrb[0].mxu0
        %v1132 = vpop.f32.mrb[0].mxu0
        %v1133 = vadd.f32 %v973, %v1132
        %v1134 = vpop.f32.mrb[0].mxu0
        %1135 = vmatprep.mubr.bf16.mxu0 0
        %1136 = vmatmul.mubr.bf16.gmra.mrb[0].mxu0 %v963
        %v1137 = vpop.f32.mrb[0].mxu0
        %v1138 = vadd.f32 %v973, %v1137
        %v1139 = vpop.f32.mrb[0].mxu0
        %v1140 = vpop.f32.mrb[0].mxu0
        %v1141 = vadd.f32 %v973, %v1140
        %v1142 = vpop.f32.mrb[0].mxu0
        %1143 = vmatprep.mubr.bf16.mxu0 0
        %1144 = vmatmul.mubr.bf16.gmra.mrb[0].mxu0 %v964
        %v1145 = vpop.f32.mrb[0].mxu0
        %v1146 = vadd.f32 %v973, %v1145
        %v1147 = vpop.f32.mrb[0].mxu0
        %v1148 = vpop.f32.mrb[0].mxu0
        %v1149 = vadd.f32 %v973, %v1148
        %v1150 = vpop.f32.mrb[0].mxu0
        %1151 = vmatprep.mubr.bf16.mxu0 0
        %1152 = vmatmul.mubr.bf16.gmra.mrb[0].mxu0 %v965
        %v1153 = vpop.f32.mrb[0].mxu0
        %v1154 = vadd.f32 %v973, %v1153
        %v1155 = vpop.f32.mrb[0].mxu0
        %v1156 = vpop.f32.mrb[0].mxu0
        %v1157 = vadd.f32 %v973, %v1156
        %v1158 = vpop.f32.mrb[0].mxu0
        %1159 = vmatprep.mubr.bf16.mxu0 0
        %1160 = vmatmul.mubr.bf16.gmra.mrb[0].mxu0 %v966
        %v1161 = vpop.f32.mrb[0].mxu0
        %v1162 = vadd.f32 %v973, %v1161
        %v1163 = vpop.f32.mrb[0].mxu0
        %v1164 = vpop.f32.mrb[0].mxu0
        %v1165 = vadd.f32 %v973, %v1164
        %v1166 = vpop.f32.mrb[0].mxu0
        %1167 = vmatprep.mubr.bf16.mxu0 0
        %1168 = vmatmul.mubr.bf16.gmra.mrb[0].mxu0 %v967
        %v1169 = vpop.f32.mrb[0].mxu0
        %v1170 = vadd.f32 %v973, %v1169
        %v1171 = vpop.f32.mrb[0].mxu0
        %v1172 = vpop.f32.mrb[0].mxu0
        %v1173 = vadd.f32 %v973, %v1172
        %v1174 = vpop.f32.mrb[0].mxu0
        %1175 = vmatprep.mubr.bf16.mxu0 0
        %1176 = vmatmul.mubr.bf16.gmra.mrb[0].mxu0 %v968
        %v1177 = vpop.f32.mrb[0].mxu0
        %v1178 = vadd.f32 %v973, %v1177
        %v1179 = vpop.f32.mrb[0].mxu0
        %v1180 = vpop.f32.mrb[0].mxu0
        %v1181 = vadd.f32 %v973, %v1180
        %v1182 = vpop.f32.mrb[0].mxu0
        %1183 = vdwg.mxu0
        %1184 = vst [vmem:[%s340] sm:$0xff] %v1058
        %1185 = vst [vmem:[%s340 + $0x8] sm:$0xff] %v1061
        %1186 = vst [vmem:[%s340 + $0x10] sm:$0xff] %v1066
        %1187 = vst [vmem:[%s340 + $0x18] sm:$0xff] %v1069
        %1188 = vst [vmem:[%s340 + $0x20] sm:$0xff] %v1074
        %1189 = vst [vmem:[%s340 + $0x28] sm:$0xff] %v1077
        %1190 = vst [vmem:[%s340 + $0x30] sm:$0xff] %v1082
        %1191 = vst [vmem:[%s340 + $0x38] sm:$0xff] %v1085
        %1192 = vst [vmem:[%s340 + $0x40] sm:$0xff] %v1090
        %1193 = vst [vmem:[%s340 + $0x48] sm:$0xff] %v1093
        %1194 = vst [vmem:[%s340 + $0x50] sm:$0xff] %v1098
        %1195 = vst [vmem:[%s340 + $0x58] sm:$0xff] %v1101
        %1196 = vst [vmem:[%s340 + $0x60] sm:$0xff] %v1106
        %1197 = vst [vmem:[%s340 + $0x68] sm:$0xff] %v1109
        %1198 = vst [vmem:[%s340 + $0x70] sm:$0xff] %v1114
        %1199 = vst [vmem:[%s340 + $0x78] sm:$0xff] %v1117
        %1200 = vst [vmem:[%s340 + $0x80] sm:$0xff] %v1122
        %1201 = vst [vmem:[%s340 + $0x88] sm:$0xff] %v1125
        %1202 = vst [vmem:[%s340 + $0x90] sm:$0xff] %v1130
        %1203 = vst [vmem:[%s340 + $0x98] sm:$0xff] %v1133
        %1204 = vst [vmem:[%s340 + $0xa0] sm:$0xff] %v1138
        %1205 = vst [vmem:[%s340 + $0xa8] sm:$0xff] %v1141
        %1206 = vst [vmem:[%s340 + $0xb0] sm:$0xff] %v1146
        %1207 = vst [vmem:[%s340 + $0xb8] sm:$0xff] %v1149
        %1208 = vst [vmem:[%s340 + $0xc0] sm:$0xff] %v1154
        %1209 = vst [vmem:[%s340 + $0xc8] sm:$0xff] %v1157
        %1210 = vst [vmem:[%s340 + $0xd0] sm:$0xff] %v1162
        %1211 = vst [vmem:[%s340 + $0xd8] sm:$0xff] %v1165
        %1212 = vst [vmem:[%s340 + $0xe0] sm:$0xff] %v1170
        %1213 = vst [vmem:[%s340 + $0xe8] sm:$0xff] %v1173
        %1214 = vst [vmem:[%s340 + $0xf0] sm:$0xff] %v1178
        %1215 = vst [vmem:[%s340 + $0xf8] sm:$0xff] %v1181
        %s1216 = sand.u32 %s186, 1
        %s1217 = scalar_lea.sflag [#allocation4], %s1216
        %s1218 = sand.u32 %s186, 1
        %s1219 = smul.addr %s1218, 256
        %s1220 = scalar_lea.vmem [#allocation10], %s1219
        // Predicated region
        $region65: #{tpu_custom_call.1} parent=47 // pred_check
          %p1221 = pneg %p196
        $region66: #{tpu_custom_call.1} parent=47 // pred_check_branch
          %1223 = sbr.rel (%p1221) target = $region68
        $region67: #{tpu_custom_call.1} parent=47 // pred_region
          %s1224 = smul.u32 32, %s26
          %s1226 = ssub.s32 4096, 4096
          %1227 = vsyncadd %s1217, %s1226
          %s1228 = smul.addr %s1224, 128
          %s1229 = scalar_lea.hbm %s7, %s1228
          %s1230 = sshll.u32 %s1220, 4
          %s1231 = int_to_ptr.vmem [resolvable:$true] %s1230
          %1236 = dma.vmem_to_hbm [thread:$0]  %s1231, 4096, %s1229, %s1217, 128, 128, 8
        $region68: #{tpu_custom_call.1} parent=47 // pred_fallthru
          _
      $region48: #{tpu_custom_call.1} parent=5 // pred_fallthru
        _
      %p1237 = scmp.le.s32.totalorder 2, %s21
      // Predicated region
      $region69: #{tpu_custom_call.1} parent=5 // pred_check
        %p1238 = pneg %p1237
      $region70: #{tpu_custom_call.1} parent=5 // pred_check_branch
        %1240 = sbr.rel (%p1238) target = $region72
      $region71: #{tpu_custom_call.1} parent=5 // pred_region
        %s1241 = ssub.s32 %s21, 2
        // Predicated region
        $region73: #{tpu_custom_call.1} parent=71 // pred_check
          %p1242 = pneg %p202
        $region74: #{tpu_custom_call.1} parent=71 // pred_check_branch
          %1244 = sbr.rel (%p1242) target = $region76
        $region75: #{tpu_custom_call.1} parent=71 // pred_region
          %s1245 = sand.u32 %s187, 1
          %s1246 = scalar_lea.sflag [#allocation4], %s1245
          %s1247 = sand.u32 %s187, 1
          %s1248 = smul.addr %s1247, 256
          %s1249 = scalar_lea.vmem [#allocation10], %s1248
          %1250 = dma.done %s1246, 4096
        $region76: #{tpu_custom_call.1} parent=71 // pred_fallthru
          _
      $region72: #{tpu_custom_call.1} parent=5 // pred_fallthru
        _
    $region6: #{tpu_custom_call.1} parent=1 // loop_footer
      %s25 = sadd.s32 1, %s21
    $region7: #{tpu_custom_call.1} parent=1 // loop_footer_branch
      %20 = sbr.rel target = $region3
    $region8: #{tpu_custom_call.1} parent=1 // loop_exit
      _
    %1251 = vsyncpa [#allocation3], 1
    %s1252 = scalar_lea.sflag [#allocation3], 1
    %1253 = vsyncpa %s1252, 1
    %1254 = vsyncpa [#allocation6], 1
    %1255 = vsyncpa [#allocation9], 1
    %1256 = vsyncpa [#allocation4], 1
    %s1257 = scalar_lea.sflag [#allocation4], 1
    %1258 = vsyncpa %s1257, 1

</llo_original>
